<compile_context>
chip_gen: v6e
topology: v6e:2x2x1
jax: 0.10.0
libtpu: 0.0.40
codegen_flags: <defaults>
</compile_context>

<pallas_src>
import functools

import jax
import jax.numpy as jnp
from jax.experimental import pallas as pl
from jax.experimental.pallas import tpu as pltpu


def _full_spec(shape):
    # Whole array as a single block (no grid -> zero-arg index_map).
    return pl.BlockSpec(shape, lambda: (0,) * len(shape))


def _vmem_limit_bytes():
    """Per-generation VMEM budget (v5e/v6e: 128 MiB/TC, v7x: 64 MiB/TC) minus headroom."""
    default_cap = 64 * 1024 * 1024
    try:
        cap = int(getattr(pltpu.get_tpu_info(), "vmem_capacity_bytes", default_cap))
    except Exception:  # pragma: no cover - conservative fallback
        cap = default_cap
    return max(16 * 1024 * 1024, min(cap - 16 * 1024 * 1024, 100 * 1024 * 1024))


# ---------------------------------------------------------------------------
# Fused decoder-layer kernel: self-attn -> cross-attn -> FFN, all VMEM-resident
# ---------------------------------------------------------------------------
def _make_decoder_kernel(*, n_heads, dim_k, dim_v, temp, batch, len_q, len_enc,
                         compute_dtype, self_causal, has_self_mask, has_cross_mask):
    f32 = jnp.float32
    cdt = compute_dtype
    inv_temp = 1.0 / float(temp)
    B, Lq, Le, H = batch, len_q, len_enc, n_heads

    def mm(a, b):
        # MXU matmul; operands cast to compute dtype, f32 accumulation.
        return jnp.dot(a.astype(cdt), b.astype(cdt), preferred_element_type=f32)

    def causal_masked():
        # In-kernel causal mask (True where the score must be masked) -> no mask DMA.
        row = jax.lax.broadcasted_iota(jnp.int32, (Lq, Lq), 0)
        col = jax.lax.broadcasted_iota(jnp.int32, (Lq, Lq), 1)
        return (col > row)[None, :, :]                           # (1, Lq, Lq), broadcasts over B

    def mha(x_q, x_kv, l_kv, masked, params, att_ref):
        """x_q: (B*Lq, D), x_kv: (B*l_kv, D), masked: bool (…, Lq, l_kv) or None."""
        wq_r, bq_r, wk_r, bk_r, wv_r, bv_r, wo_r, bo_r = params

        # Fused all-head projections over the batch-merged row dim; 1/temp folded into Q.
        qp = (mm(x_q, wq_r[...]) + bq_r[...]) * inv_temp          # (B*Lq,  H*dk)
        kp = mm(x_kv, wk_r[...]) + bk_r[...]                      # (B*lkv, H*dk)
        vp = mm(x_kv, wv_r[...]) + bv_r[...]                      # (B*lkv, H*dv)

        att_heads = []
        ctx_cols = []
        # Static unroll over heads (small H); score/context matmuls batched over B.
        for h in range(H):
            qh = qp[:, h * dim_k:(h + 1) * dim_k].reshape(B, Lq, dim_k)
            kh = kp[:, h * dim_k:(h + 1) * dim_k].reshape(B, l_kv, dim_k)
            vh = vp[:, h * dim_v:(h + 1) * dim_v].reshape(B, l_kv, dim_v)

            s = jnp.einsum("bqd,bkd->bqk", qh.astype(cdt), kh.astype(cdt),
                           preferred_element_type=f32)            # (B, Lq, lkv) f32
            if masked is not None:
                s = jnp.where(masked, -1e9, s)                    # torch masked_fill semantics
            m = jnp.max(s, axis=-1, keepdims=True)
            e = jnp.exp(s - m)
            p = e * pl.reciprocal(jnp.sum(e, axis=-1, keepdims=True), approx=True)
            att_heads.append(p)

            ctx = jnp.einsum("bqk,bkd->bqd", p.astype(cdt), vh.astype(cdt),
                             preferred_element_type=f32)          # (B, Lq, dv)
            ctx_cols.append(ctx.reshape(B * Lq, dim_v))

        # One lane-dense attention store per attention (head folded into the leading axis).
        att_ref[...] = jnp.concatenate(att_heads, axis=0).astype(att_ref.dtype)  # (H*B, Lq, lkv)

        # Lane-packed context slab -> ONE output-projection matmul with K = H*dv.
        ctx_all = jnp.concatenate(ctx_cols, axis=-1)               # (B*Lq, H*dv)
        return mm(ctx_all, wo_r[...]) + bo_r[...] + x_q            # residual

    def kernel(*refs):
        refs = list(refs)
        out_ref, att1_ref, att2_ref = refs[-3], refs[-2], refs[-1]
        it = iter(refs[:-3])
        x_ref = next(it)
        enc_ref = next(it)
        self_mask_ref = next(it) if has_self_mask else None
        cross_mask_ref = next(it) if has_cross_mask else None
        p1 = tuple(next(it) for _ in range(8))                     # self-attention params
        p2 = tuple(next(it) for _ in range(8))                     # cross-attention params
        w1_ref, b1_ref, w2_ref, b2_ref = (next(it) for _ in range(4))

        x0 = x_ref[...]                                            # (B*Lq, D)
        enc = enc_ref[...]                                         # (B*Le, D)

        if self_causal:
            masked_self = causal_masked()
        elif has_self_mask:
            masked_self = self_mask_ref[...] == 0                  # int8 mask, 1 = keep
        else:
            masked_self = None
        masked_cross = (cross_mask_ref[...] == 0) if has_cross_mask else None

        # 1) masked self-attention + residual
        x1 = mha(x0, x0, Lq, masked_self, p1, att1_ref)
        # 2) cross-attention over encoder output + residual
        x2 = mha(x1, enc, Le, masked_cross, p2, att2_ref)
        # 3) position-wise feed-forward + residual
        hidden = jnp.maximum(mm(x2, w1_ref[...]) + b1_ref[...], 0.0)
        out_ref[...] = (mm(hidden, w2_ref[...]) + b2_ref[...] + x2).astype(out_ref.dtype)

    return kernel


# ---------------------------------------------------------------------------
# Wrapper: one pallas_call for the whole decoder layer
# ---------------------------------------------------------------------------
def decoder_layer(x, enc_x, mask_x=None, mask_enc=None, *, params, n_heads, dim_k, dim_v,
                  self_causal=False, compute_dtype=jnp.float32, att_dtype=jnp.float32):
    B, Lx, D = x.shape
    Le = enc_x.shape[1]
    H = n_heads
    temp = float(dim_k) ** 0.5

    has_self_mask = (mask_x is not None) and not self_causal
    has_cross_mask = mask_enc is not None

    kernel = _make_decoder_kernel(
        n_heads=H, dim_k=dim_k, dim_v=dim_v, temp=temp, batch=B, len_q=Lx, len_enc=Le,
        compute_dtype=compute_dtype, self_causal=self_causal,
        has_self_mask=has_self_mask, has_cross_mask=has_cross_mask)

    operands = [x.reshape(B * Lx, D), enc_x.reshape(B * Le, D)]
    if has_self_mask:
        operands.append((mask_x != 0).astype(jnp.int8))            # int8, not f32
    if has_cross_mask:
        operands.append((mask_enc != 0).astype(jnp.int8))
    operands += [*params["mha1"], *params["mha2"], *params["ffn"]]

    out_shapes = [
        jax.ShapeDtypeStruct((B * Lx, D), x.dtype),                # activations (rows merged)
        jax.ShapeDtypeStruct((H * B, Lx, Lx), att_dtype),          # att1: head-major, Lk-dense
        jax.ShapeDtypeStruct((H * B, Lx, Le), att_dtype),          # att2: head-major, Lk-dense
    ]

    out2d, att1_raw, att2_raw = pl.pallas_call(
        kernel,
        in_specs=[_full_spec(a.shape) for a in operands],
        out_specs=[_full_spec(s.shape) for s in out_shapes],
        out_shape=out_shapes,
        compiler_params=pltpu.CompilerParams(vmem_limit_bytes=_vmem_limit_bytes()),
    )(*operands)

    out = out2d.reshape(B, Lx, D)
    # Layout plumbing only (outside the kernel): (H, B, Lq, Lk) -> torch (B, H, Lq, Lk).
    att1 = att1_raw.reshape(H, B, Lx, Lx).transpose(1, 0, 2, 3)
    att2 = att2_raw.reshape(H, B, Lx, Le).transpose(1, 0, 2, 3)
    return out, att1, att2


# ---------------------------------------------------------------------------
# Pure-JAX reference (for correctness check)
# ---------------------------------------------------------------------------
def ref_mha(q, kv, mask, params, *, n_heads, dim_k, dim_v, temp):
    wq, bq, wk, bk, wv, bv, wfc, bfc = params
    B, Lq, D = q.shape
    Lk = kv.shape[1]
    qp = (q @ wq + bq).reshape(B, Lq, n_heads, dim_k).transpose(0, 2, 1, 3)
    kp = (kv @ wk + bk).reshape(B, Lk, n_heads, dim_k).transpose(0, 2, 1, 3)
    vp = (kv @ wv + bv).reshape(B, Lk, n_heads, dim_v).transpose(0, 2, 1, 3)
    s = jnp.einsum("bhqd,bhkd->bhqk", qp / temp, kp)
    s = jnp.where(mask[:, None] == 0, -1e9, s)
    att = jax.nn.softmax(s, axis=-1)
    ctx = jnp.einsum("bhqk,bhkd->bhqd", att, vp).transpose(0, 2, 1, 3).reshape(B, Lq, n_heads * dim_v)
    return ctx @ wfc + bfc + q, att


def ref_decoder(x, enc_x, mask_x, mask_enc, params, *, n_heads, dim_k, dim_v):
    temp = float(dim_k) ** 0.5
    x1, att1 = ref_mha(x, x, mask_x, params["mha1"], n_heads=n_heads, dim_k=dim_k, dim_v=dim_v, temp=temp)
    x2, att2 = ref_mha(x1, enc_x, mask_enc, params["mha2"], n_heads=n_heads, dim_k=dim_k, dim_v=dim_v, temp=temp)
    w1, b1, w2, b2 = params["ffn"]
    x3 = jnp.maximum(x2 @ w1 + b1, 0.0) @ w2 + b2 + x2
    return x3, att1, att2


# ---------------------------------------------------------------------------
def init_params(key, input_dim, dim_k, dim_v, dim_hidden, n_head):
    ks = jax.random.split(key, 24)
    it = iter(ks)
    scale = 0.05

    def lin(in_d, out_d):
        w = scale * jax.random.normal(next(it), (in_d, out_d), jnp.float32)
        b = scale * jax.random.normal(next(it), (1, out_d), jnp.float32)
        return w, b

    def mha():
        wq, bq = lin(input_dim, n_head * dim_k)
        wk, bk = lin(input_dim, n_head * dim_k)
        wv, bv = lin(input_dim, n_head * dim_v)
        wfc, bfc = lin(n_head * dim_v, input_dim)
        return (wq, bq, wk, bk, wv, bv, wfc, bfc)

    mha1 = mha()
    mha2 = mha()
    w1, b1 = lin(input_dim, dim_hidden)
    w2, b2 = lin(dim_hidden, input_dim)
    return {"mha1": mha1, "mha2": mha2, "ffn": (w1, b1, w2, b2)}


if __name__ == "__main__":
    B, L_x, L_enc = 2, 8, 8
    input_dim, dim_k, dim_v, dim_hidden, n_head = 32, 16, 16, 64, 2

    key = jax.random.PRNGKey(0)
    k_x, k_enc, k_p = jax.random.split(key, 3)

    x = jax.random.normal(k_x, (B, L_x, input_dim), jnp.float32)
    enc_x = jax.random.normal(k_enc, (B, L_enc, input_dim), jnp.float32)
    params = init_params(k_p, input_dim, dim_k, dim_v, dim_hidden, n_head)

    # Kernel: causal self-attention mask generated in-kernel, all-ones cross mask elided.
    out, att1, att2 = decoder_layer(
        x, enc_x, params=params, n_heads=n_head, dim_k=dim_k, dim_v=dim_v,
        self_causal=True, compute_dtype=jnp.float32)
    jax.block_until_ready((out, att1, att2))

    # Reference with explicit masks (causal self, all-ones cross) — same semantics.
    mask_x = jnp.broadcast_to(
        jnp.tril(jnp.ones((L_x, L_x), jnp.float32))[None], (B, L_x, L_x))
    mask_enc = jnp.ones((B, L_x, L_enc), jnp.float32)
    r_out, r_att1, r_att2 = ref_decoder(x, enc_x, mask_x, mask_enc, params,
                                        n_heads=n_head, dim_k=dim_k, dim_v=dim_v)

    # f32 path: tight parity (tolerance covers the EUP approximate-reciprocal softmax).
    assert jnp.allclose(out, r_out, atol=2e-3, rtol=2e-3)
    assert jnp.allclose(att1, r_att1, atol=2e-3, rtol=2e-3)
    assert jnp.allclose(att2, r_att2, atol=2e-3, rtol=2e-3)

    # bf16 MXU path (recommended on v6e/v7x): f32 accumulation/softmax, looser tolerance.
    out_bf, att1_bf, att2_bf = decoder_layer(
        x, enc_x, params=params, n_heads=n_head, dim_k=dim_k, dim_v=dim_v,
        self_causal=True, compute_dtype=jnp.bfloat16, att_dtype=jnp.float32)
    jax.block_until_ready((out_bf, att1_bf, att2_bf))
    assert jnp.allclose(out_bf, r_out, atol=5e-2, rtol=5e-2)
    assert jnp.allclose(att1_bf, r_att1, atol=5e-2, rtol=5e-2)
    assert jnp.allclose(att2_bf, r_att2, atol=5e-2, rtol=5e-2)

    print("KERNEL_OK")
</pallas_src>

<mosaic_0001>
module attributes {stable_mosaic.version = 11 : i64} {
  func.func @kernel(%arg0: memref<16x32xf32, #tpu.memory_space<vmem>>, %arg1: memref<16x32xf32, #tpu.memory_space<vmem>>, %arg2: memref<32x32xf32, #tpu.memory_space<vmem>>, %arg3: memref<1x32xf32, #tpu.memory_space<vmem>>, %arg4: memref<32x32xf32, #tpu.memory_space<vmem>>, %arg5: memref<1x32xf32, #tpu.memory_space<vmem>>, %arg6: memref<32x32xf32, #tpu.memory_space<vmem>>, %arg7: memref<1x32xf32, #tpu.memory_space<vmem>>, %arg8: memref<32x32xf32, #tpu.memory_space<vmem>>, %arg9: memref<1x32xf32, #tpu.memory_space<vmem>>, %arg10: memref<32x32xf32, #tpu.memory_space<vmem>>, %arg11: memref<1x32xf32, #tpu.memory_space<vmem>>, %arg12: memref<32x32xf32, #tpu.memory_space<vmem>>, %arg13: memref<1x32xf32, #tpu.memory_space<vmem>>, %arg14: memref<32x32xf32, #tpu.memory_space<vmem>>, %arg15: memref<1x32xf32, #tpu.memory_space<vmem>>, %arg16: memref<32x32xf32, #tpu.memory_space<vmem>>, %arg17: memref<1x32xf32, #tpu.memory_space<vmem>>, %arg18: memref<32x64xf32, #tpu.memory_space<vmem>>, %arg19: memref<1x64xf32, #tpu.memory_space<vmem>>, %arg20: memref<64x32xf32, #tpu.memory_space<vmem>>, %arg21: memref<1x32xf32, #tpu.memory_space<vmem>>, %arg22: memref<16x32xf32, #tpu.memory_space<vmem>>, %arg23: memref<4x8x8xf32, #tpu.memory_space<vmem>>, %arg24: memref<4x8x8xf32, #tpu.memory_space<vmem>>) attributes {dimension_semantics = [], scalar_prefetch = 0 : i64, scratch_operands = 0 : i64, tpu.core_type = #tpu.core_type<tc>} {
    %c0 = arith.constant 0 : index
    %c0_0 = arith.constant 0 : index
    %0 = vector.load %arg0[%c0, %c0_0] : memref<16x32xf32, #tpu.memory_space<vmem>>, vector<16x32xf32>
    %c0_1 = arith.constant 0 : index
    %c0_2 = arith.constant 0 : index
    %1 = vector.load %arg1[%c0_1, %c0_2] : memref<16x32xf32, #tpu.memory_space<vmem>>, vector<16x32xf32>
    %2 = tpu.iota {dimensions = array<i32: 0>} : vector<8x8xi32>
    %3 = tpu.iota {dimensions = array<i32: 1>} : vector<8x8xi32>
    %4 = arith.cmpi sgt, %3, %2 : vector<8x8xi32>
    %5 = vector.shape_cast %4 : vector<8x8xi1> to vector<1x8x8xi1>
    %c0_3 = arith.constant 0 : index
    %c0_4 = arith.constant 0 : index
    %6 = vector.load %arg2[%c0_3, %c0_4] : memref<32x32xf32, #tpu.memory_space<vmem>>, vector<32x32xf32>
    %cst = arith.constant dense<0.000000e+00> : vector<16x32xf32>
    %7 = tpu.matmul %0, %6, %cst {dimension_numbers = #tpu.dot_dimension_numbers<[1], [0], [0], [1], [0, 0, 1, 1], [], []>} : vector<16x32xf32>, vector<32x32xf32>, vector<16x32xf32> -> vector<16x32xf32>
    %c0_5 = arith.constant 0 : index
    %c0_6 = arith.constant 0 : index
    %8 = vector.load %arg3[%c0_5, %c0_6] : memref<1x32xf32, #tpu.memory_space<vmem>>, vector<1x32xf32>
    %9 = vector.broadcast %8 : vector<1x32xf32> to vector<16x32xf32>
    %10 = arith.addf %7, %9 : vector<16x32xf32>
    %cst_7 = arith.constant 2.500000e-01 : f32
    %11 = vector.broadcast %cst_7 : f32 to vector<16x32xf32>
    %12 = arith.mulf %10, %11 : vector<16x32xf32>
    %c0_8 = arith.constant 0 : index
    %c0_9 = arith.constant 0 : index
    %13 = vector.load %arg4[%c0_8, %c0_9] : memref<32x32xf32, #tpu.memory_space<vmem>>, vector<32x32xf32>
    %cst_10 = arith.constant dense<0.000000e+00> : vector<16x32xf32>
    %14 = tpu.matmul %0, %13, %cst_10 {dimension_numbers = #tpu.dot_dimension_numbers<[1], [0], [0], [1], [0, 0, 1, 1], [], []>} : vector<16x32xf32>, vector<32x32xf32>, vector<16x32xf32> -> vector<16x32xf32>
    %c0_11 = arith.constant 0 : index
    %c0_12 = arith.constant 0 : index
    %15 = vector.load %arg5[%c0_11, %c0_12] : memref<1x32xf32, #tpu.memory_space<vmem>>, vector<1x32xf32>
    %16 = vector.broadcast %15 : vector<1x32xf32> to vector<16x32xf32>
    %17 = arith.addf %14, %16 : vector<16x32xf32>
    %c0_13 = arith.constant 0 : index
    %c0_14 = arith.constant 0 : index
    %18 = vector.load %arg6[%c0_13, %c0_14] : memref<32x32xf32, #tpu.memory_space<vmem>>, vector<32x32xf32>
    %cst_15 = arith.constant dense<0.000000e+00> : vector<16x32xf32>
    %19 = tpu.matmul %0, %18, %cst_15 {dimension_numbers = #tpu.dot_dimension_numbers<[1], [0], [0], [1], [0, 0, 1, 1], [], []>} : vector<16x32xf32>, vector<32x32xf32>, vector<16x32xf32> -> vector<16x32xf32>
    %c0_16 = arith.constant 0 : index
    %c0_17 = arith.constant 0 : index
    %20 = vector.load %arg7[%c0_16, %c0_17] : memref<1x32xf32, #tpu.memory_space<vmem>>, vector<1x32xf32>
    %21 = vector.broadcast %20 : vector<1x32xf32> to vector<16x32xf32>
    %22 = arith.addf %19, %21 : vector<16x32xf32>
    %23 = vector.extract_strided_slice %12 {offsets = [0, 0], sizes = [16, 16], strides = [1, 1]} : vector<16x32xf32> to vector<16x16xf32>
    %24 = vector.shape_cast %23 : vector<16x16xf32> to vector<2x8x16xf32>
    %25 = vector.extract_strided_slice %17 {offsets = [0, 0], sizes = [16, 16], strides = [1, 1]} : vector<16x32xf32> to vector<16x16xf32>
    %26 = vector.shape_cast %25 : vector<16x16xf32> to vector<2x8x16xf32>
    %27 = vector.extract_strided_slice %22 {offsets = [0, 0], sizes = [16, 16], strides = [1, 1]} : vector<16x32xf32> to vector<16x16xf32>
    %28 = vector.shape_cast %27 : vector<16x16xf32> to vector<2x8x16xf32>
    "tpu.trace_start"() <{level = 10 : i32, message = "bqd,bkd->bqk"}> : () -> ()
    %cst_18 = arith.constant dense<0.000000e+00> : vector<2x8x8xf32>
    %29 = tpu.matmul %24, %26, %cst_18 {dimension_numbers = #tpu.dot_dimension_numbers<[2], [2], [1], [1], [0, 0, 0, 1, 1, 1], [0], [0]>} : vector<2x8x16xf32>, vector<2x8x16xf32>, vector<2x8x8xf32> -> vector<2x8x8xf32>
    %cst_19 = arith.constant -1.000000e+09 : f32
    "tpu.trace_stop"() : () -> ()
    %30 = vector.shape_cast %5 : vector<1x8x8xi1> to vector<1x8x8xi1>
    %31 = vector.broadcast %30 : vector<1x8x8xi1> to vector<2x8x8xi1>
    %32 = vector.broadcast %cst_19 : f32 to vector<2x8x8xf32>
    %33 = arith.select %31, %32, %29 : vector<2x8x8xi1>, vector<2x8x8xf32>
    %cst_20 = arith.constant dense<0xFF800000> : vector<2x8xf32>
    %34 = vector.multi_reduction <maximumf>, %33, %cst_20 [2] : vector<2x8x8xf32> to vector<2x8xf32>
    %35 = vector.shape_cast %34 : vector<2x8xf32> to vector<2x8x1xf32>
    %36 = vector.broadcast %35 : vector<2x8x1xf32> to vector<2x8x8xf32>
    %37 = arith.subf %33, %36 : vector<2x8x8xf32>
    %38 = math.exp %37 : vector<2x8x8xf32>
    %cst_21 = arith.constant dense<0.000000e+00> : vector<2x8xf32>
    %39 = vector.multi_reduction <add>, %38, %cst_21 [2] : vector<2x8x8xf32> to vector<2x8xf32>
    %40 = vector.shape_cast %39 : vector<2x8xf32> to vector<2x8x1xf32>
    %41 = tpu.reciprocal %40 {approx = true} : vector<2x8x1xf32> -> vector<2x8x1xf32>
    %42 = vector.broadcast %41 : vector<2x8x1xf32> to vector<2x8x8xf32>
    %43 = arith.mulf %38, %42 : vector<2x8x8xf32>
    "tpu.trace_start"() <{level = 10 : i32, message = "bqk,bkd->bqd"}> : () -> ()
    %cst_22 = arith.constant dense<0.000000e+00> : vector<2x8x16xf32>
    %44 = tpu.matmul %43, %28, %cst_22 {dimension_numbers = #tpu.dot_dimension_numbers<[2], [1], [1], [2], [0, 0, 0, 1, 1, 2], [0], [0]>} : vector<2x8x8xf32>, vector<2x8x16xf32>, vector<2x8x16xf32> -> vector<2x8x16xf32>
    "tpu.trace_stop"() : () -> ()
    %45 = vector.shape_cast %44 : vector<2x8x16xf32> to vector<16x16xf32>
    %46 = vector.extract_strided_slice %12 {offsets = [0, 16], sizes = [16, 16], strides = [1, 1]} : vector<16x32xf32> to vector<16x16xf32>
    %47 = vector.shape_cast %46 : vector<16x16xf32> to vector<2x8x16xf32>
    %48 = vector.extract_strided_slice %17 {offsets = [0, 16], sizes = [16, 16], strides = [1, 1]} : vector<16x32xf32> to vector<16x16xf32>
    %49 = vector.shape_cast %48 : vector<16x16xf32> to vector<2x8x16xf32>
    %50 = vector.extract_strided_slice %22 {offsets = [0, 16], sizes = [16, 16], strides = [1, 1]} : vector<16x32xf32> to vector<16x16xf32>
    %51 = vector.shape_cast %50 : vector<16x16xf32> to vector<2x8x16xf32>
    "tpu.trace_start"() <{level = 10 : i32, message = "bqd,bkd->bqk"}> : () -> ()
    %cst_23 = arith.constant dense<0.000000e+00> : vector<2x8x8xf32>
    %52 = tpu.matmul %47, %49, %cst_23 {dimension_numbers = #tpu.dot_dimension_numbers<[2], [2], [1], [1], [0, 0, 0, 1, 1, 1], [0], [0]>} : vector<2x8x16xf32>, vector<2x8x16xf32>, vector<2x8x8xf32> -> vector<2x8x8xf32>
    %cst_24 = arith.constant -1.000000e+09 : f32
    "tpu.trace_stop"() : () -> ()
    %53 = vector.shape_cast %5 : vector<1x8x8xi1> to vector<1x8x8xi1>
    %54 = vector.broadcast %53 : vector<1x8x8xi1> to vector<2x8x8xi1>
    %55 = vector.broadcast %cst_24 : f32 to vector<2x8x8xf32>
    %56 = arith.select %54, %55, %52 : vector<2x8x8xi1>, vector<2x8x8xf32>
    %cst_25 = arith.constant dense<0xFF800000> : vector<2x8xf32>
    %57 = vector.multi_reduction <maximumf>, %56, %cst_25 [2] : vector<2x8x8xf32> to vector<2x8xf32>
    %58 = vector.shape_cast %57 : vector<2x8xf32> to vector<2x8x1xf32>
    %59 = vector.broadcast %58 : vector<2x8x1xf32> to vector<2x8x8xf32>
    %60 = arith.subf %56, %59 : vector<2x8x8xf32>
    %61 = math.exp %60 : vector<2x8x8xf32>
    %cst_26 = arith.constant dense<0.000000e+00> : vector<2x8xf32>
    %62 = vector.multi_reduction <add>, %61, %cst_26 [2] : vector<2x8x8xf32> to vector<2x8xf32>
    %63 = vector.shape_cast %62 : vector<2x8xf32> to vector<2x8x1xf32>
    %64 = tpu.reciprocal %63 {approx = true} : vector<2x8x1xf32> -> vector<2x8x1xf32>
    %65 = vector.broadcast %64 : vector<2x8x1xf32> to vector<2x8x8xf32>
    %66 = arith.mulf %61, %65 : vector<2x8x8xf32>
    "tpu.trace_start"() <{level = 10 : i32, message = "bqk,bkd->bqd"}> : () -> ()
    %cst_27 = arith.constant dense<0.000000e+00> : vector<2x8x16xf32>
    %67 = tpu.matmul %66, %51, %cst_27 {dimension_numbers = #tpu.dot_dimension_numbers<[2], [1], [1], [2], [0, 0, 0, 1, 1, 2], [0], [0]>} : vector<2x8x8xf32>, vector<2x8x16xf32>, vector<2x8x16xf32> -> vector<2x8x16xf32>
    "tpu.trace_stop"() : () -> ()
    %68 = vector.shape_cast %67 : vector<2x8x16xf32> to vector<16x16xf32>
    %69 = tpu.concatenate %43, %66 in 0 : vector<2x8x8xf32>, vector<2x8x8xf32> -> vector<4x8x8xf32>
    %c0_28 = arith.constant 0 : index
    %c0_29 = arith.constant 0 : index
    %c0_30 = arith.constant 0 : index
    %70 = vector.load %arg23[%c0_28, %c0_29, %c0_30] : memref<4x8x8xf32, #tpu.memory_space<vmem>>, vector<4x8x8xf32>
    tpu.vector_store %arg23[%c0_28, %c0_29, %c0_30], %69 {strides = array<i32>} : memref<4x8x8xf32, #tpu.memory_space<vmem>>, vector<4x8x8xf32>,
    %71 = tpu.concatenate %45, %68 in 1 : vector<16x16xf32>, vector<16x16xf32> -> vector<16x32xf32>
    %c0_31 = arith.constant 0 : index
    %c0_32 = arith.constant 0 : index
    %72 = vector.load %arg8[%c0_31, %c0_32] : memref<32x32xf32, #tpu.memory_space<vmem>>, vector<32x32xf32>
    %cst_33 = arith.constant dense<0.000000e+00> : vector<16x32xf32>
    %73 = tpu.matmul %71, %72, %cst_33 {dimension_numbers = #tpu.dot_dimension_numbers<[1], [0], [0], [1], [0, 0, 1, 1], [], []>} : vector<16x32xf32>, vector<32x32xf32>, vector<16x32xf32> -> vector<16x32xf32>
    %c0_34 = arith.constant 0 : index
    %c0_35 = arith.constant 0 : index
    %74 = vector.load %arg9[%c0_34, %c0_35] : memref<1x32xf32, #tpu.memory_space<vmem>>, vector<1x32xf32>
    %75 = vector.broadcast %74 : vector<1x32xf32> to vector<16x32xf32>
    %76 = arith.addf %73, %75 : vector<16x32xf32>
    %77 = arith.addf %76, %0 : vector<16x32xf32>
    %c0_36 = arith.constant 0 : index
    %c0_37 = arith.constant 0 : index
    %78 = vector.load %arg10[%c0_36, %c0_37] : memref<32x32xf32, #tpu.memory_space<vmem>>, vector<32x32xf32>
    %cst_38 = arith.constant dense<0.000000e+00> : vector<16x32xf32>
    %79 = tpu.matmul %77, %78, %cst_38 {dimension_numbers = #tpu.dot_dimension_numbers<[1], [0], [0], [1], [0, 0, 1, 1], [], []>} : vector<16x32xf32>, vector<32x32xf32>, vector<16x32xf32> -> vector<16x32xf32>
    %c0_39 = arith.constant 0 : index
    %c0_40 = arith.constant 0 : index
    %80 = vector.load %arg11[%c0_39, %c0_40] : memref<1x32xf32, #tpu.memory_space<vmem>>, vector<1x32xf32>
    %81 = vector.broadcast %80 : vector<1x32xf32> to vector<16x32xf32>
    %82 = arith.addf %79, %81 : vector<16x32xf32>
    %cst_41 = arith.constant 2.500000e-01 : f32
    %83 = vector.broadcast %cst_41 : f32 to vector<16x32xf32>
    %84 = arith.mulf %82, %83 : vector<16x32xf32>
    %c0_42 = arith.constant 0 : index
    %c0_43 = arith.constant 0 : index
    %85 = vector.load %arg12[%c0_42, %c0_43] : memref<32x32xf32, #tpu.memory_space<vmem>>, vector<32x32xf32>
    %cst_44 = arith.constant dense<0.000000e+00> : vector<16x32xf32>
    %86 = tpu.matmul %1, %85, %cst_44 {dimension_numbers = #tpu.dot_dimension_numbers<[1], [0], [0], [1], [0, 0, 1, 1], [], []>} : vector<16x32xf32>, vector<32x32xf32>, vector<16x32xf32> -> vector<16x32xf32>
    %c0_45 = arith.constant 0 : index
    %c0_46 = arith.constant 0 : index
    %87 = vector.load %arg13[%c0_45, %c0_46] : memref<1x32xf32, #tpu.memory_space<vmem>>, vector<1x32xf32>
    %88 = vector.broadcast %87 : vector<1x32xf32> to vector<16x32xf32>
    %89 = arith.addf %86, %88 : vector<16x32xf32>
    %c0_47 = arith.constant 0 : index
    %c0_48 = arith.constant 0 : index
    %90 = vector.load %arg14[%c0_47, %c0_48] : memref<32x32xf32, #tpu.memory_space<vmem>>, vector<32x32xf32>
    %cst_49 = arith.constant dense<0.000000e+00> : vector<16x32xf32>
    %91 = tpu.matmul %1, %90, %cst_49 {dimension_numbers = #tpu.dot_dimension_numbers<[1], [0], [0], [1], [0, 0, 1, 1], [], []>} : vector<16x32xf32>, vector<32x32xf32>, vector<16x32xf32> -> vector<16x32xf32>
    %c0_50 = arith.constant 0 : index
    %c0_51 = arith.constant 0 : index
    %92 = vector.load %arg15[%c0_50, %c0_51] : memref<1x32xf32, #tpu.memory_space<vmem>>, vector<1x32xf32>
    %93 = vector.broadcast %92 : vector<1x32xf32> to vector<16x32xf32>
    %94 = arith.addf %91, %93 : vector<16x32xf32>
    %95 = vector.extract_strided_slice %84 {offsets = [0, 0], sizes = [16, 16], strides = [1, 1]} : vector<16x32xf32> to vector<16x16xf32>
    %96 = vector.shape_cast %95 : vector<16x16xf32> to vector<2x8x16xf32>
    %97 = vector.extract_strided_slice %89 {offsets = [0, 0], sizes = [16, 16], strides = [1, 1]} : vector<16x32xf32> to vector<16x16xf32>
    %98 = vector.shape_cast %97 : vector<16x16xf32> to vector<2x8x16xf32>
    %99 = vector.extract_strided_slice %94 {offsets = [0, 0], sizes = [16, 16], strides = [1, 1]} : vector<16x32xf32> to vector<16x16xf32>
    %100 = vector.shape_cast %99 : vector<16x16xf32> to vector<2x8x16xf32>
    "tpu.trace_start"() <{level = 10 : i32, message = "bqd,bkd->bqk"}> : () -> ()
    %cst_52 = arith.constant dense<0.000000e+00> : vector<2x8x8xf32>
    %101 = tpu.matmul %96, %98, %cst_52 {dimension_numbers = #tpu.dot_dimension_numbers<[2], [2], [1], [1], [0, 0, 0, 1, 1, 1], [0], [0]>} : vector<2x8x16xf32>, vector<2x8x16xf32>, vector<2x8x8xf32> -> vector<2x8x8xf32>
    "tpu.trace_stop"() : () -> ()
    %cst_53 = arith.constant dense<0xFF800000> : vector<2x8xf32>
    %102 = vector.multi_reduction <maximumf>, %101, %cst_53 [2] : vector<2x8x8xf32> to vector<2x8xf32>
    %103 = vector.shape_cast %102 : vector<2x8xf32> to vector<2x8x1xf32>
    %104 = vector.broadcast %103 : vector<2x8x1xf32> to vector<2x8x8xf32>
    %105 = arith.subf %101, %104 : vector<2x8x8xf32>
    %106 = math.exp %105 : vector<2x8x8xf32>
    %cst_54 = arith.constant dense<0.000000e+00> : vector<2x8xf32>
    %107 = vector.multi_reduction <add>, %106, %cst_54 [2] : vector<2x8x8xf32> to vector<2x8xf32>
    %108 = vector.shape_cast %107 : vector<2x8xf32> to vector<2x8x1xf32>
    %109 = tpu.reciprocal %108 {approx = true} : vector<2x8x1xf32> -> vector<2x8x1xf32>
    %110 = vector.broadcast %109 : vector<2x8x1xf32> to vector<2x8x8xf32>
    %111 = arith.mulf %106, %110 : vector<2x8x8xf32>
    "tpu.trace_start"() <{level = 10 : i32, message = "bqk,bkd->bqd"}> : () -> ()
    %cst_55 = arith.constant dense<0.000000e+00> : vector<2x8x16xf32>
    %112 = tpu.matmul %111, %100, %cst_55 {dimension_numbers = #tpu.dot_dimension_numbers<[2], [1], [1], [2], [0, 0, 0, 1, 1, 2], [0], [0]>} : vector<2x8x8xf32>, vector<2x8x16xf32>, vector<2x8x16xf32> -> vector<2x8x16xf32>
    "tpu.trace_stop"() : () -> ()
    %113 = vector.shape_cast %112 : vector<2x8x16xf32> to vector<16x16xf32>
    %114 = vector.extract_strided_slice %84 {offsets = [0, 16], sizes = [16, 16], strides = [1, 1]} : vector<16x32xf32> to vector<16x16xf32>
    %115 = vector.shape_cast %114 : vector<16x16xf32> to vector<2x8x16xf32>
    %116 = vector.extract_strided_slice %89 {offsets = [0, 16], sizes = [16, 16], strides = [1, 1]} : vector<16x32xf32> to vector<16x16xf32>
    %117 = vector.shape_cast %116 : vector<16x16xf32> to vector<2x8x16xf32>
    %118 = vector.extract_strided_slice %94 {offsets = [0, 16], sizes = [16, 16], strides = [1, 1]} : vector<16x32xf32> to vector<16x16xf32>
    %119 = vector.shape_cast %118 : vector<16x16xf32> to vector<2x8x16xf32>
    "tpu.trace_start"() <{level = 10 : i32, message = "bqd,bkd->bqk"}> : () -> ()
    %cst_56 = arith.constant dense<0.000000e+00> : vector<2x8x8xf32>
    %120 = tpu.matmul %115, %117, %cst_56 {dimension_numbers = #tpu.dot_dimension_numbers<[2], [2], [1], [1], [0, 0, 0, 1, 1, 1], [0], [0]>} : vector<2x8x16xf32>, vector<2x8x16xf32>, vector<2x8x8xf32> -> vector<2x8x8xf32>
    "tpu.trace_stop"() : () -> ()
    %cst_57 = arith.constant dense<0xFF800000> : vector<2x8xf32>
    %121 = vector.multi_reduction <maximumf>, %120, %cst_57 [2] : vector<2x8x8xf32> to vector<2x8xf32>
    %122 = vector.shape_cast %121 : vector<2x8xf32> to vector<2x8x1xf32>
    %123 = vector.broadcast %122 : vector<2x8x1xf32> to vector<2x8x8xf32>
    %124 = arith.subf %120, %123 : vector<2x8x8xf32>
    %125 = math.exp %124 : vector<2x8x8xf32>
    %cst_58 = arith.constant dense<0.000000e+00> : vector<2x8xf32>
    %126 = vector.multi_reduction <add>, %125, %cst_58 [2] : vector<2x8x8xf32> to vector<2x8xf32>
    %127 = vector.shape_cast %126 : vector<2x8xf32> to vector<2x8x1xf32>
    %128 = tpu.reciprocal %127 {approx = true} : vector<2x8x1xf32> -> vector<2x8x1xf32>
    %129 = vector.broadcast %128 : vector<2x8x1xf32> to vector<2x8x8xf32>
    %130 = arith.mulf %125, %129 : vector<2x8x8xf32>
    "tpu.trace_start"() <{level = 10 : i32, message = "bqk,bkd->bqd"}> : () -> ()
    %cst_59 = arith.constant dense<0.000000e+00> : vector<2x8x16xf32>
    %131 = tpu.matmul %130, %119, %cst_59 {dimension_numbers = #tpu.dot_dimension_numbers<[2], [1], [1], [2], [0, 0, 0, 1, 1, 2], [0], [0]>} : vector<2x8x8xf32>, vector<2x8x16xf32>, vector<2x8x16xf32> -> vector<2x8x16xf32>
    "tpu.trace_stop"() : () -> ()
    %132 = vector.shape_cast %131 : vector<2x8x16xf32> to vector<16x16xf32>
    %133 = tpu.concatenate %111, %130 in 0 : vector<2x8x8xf32>, vector<2x8x8xf32> -> vector<4x8x8xf32>
    %c0_60 = arith.constant 0 : index
    %c0_61 = arith.constant 0 : index
    %c0_62 = arith.constant 0 : index
    %134 = vector.load %arg24[%c0_60, %c0_61, %c0_62] : memref<4x8x8xf32, #tpu.memory_space<vmem>>, vector<4x8x8xf32>
    tpu.vector_store %arg24[%c0_60, %c0_61, %c0_62], %133 {strides = array<i32>} : memref<4x8x8xf32, #tpu.memory_space<vmem>>, vector<4x8x8xf32>,
    %135 = tpu.concatenate %113, %132 in 1 : vector<16x16xf32>, vector<16x16xf32> -> vector<16x32xf32>
    %c0_63 = arith.constant 0 : index
    %c0_64 = arith.constant 0 : index
    %136 = vector.load %arg16[%c0_63, %c0_64] : memref<32x32xf32, #tpu.memory_space<vmem>>, vector<32x32xf32>
    %cst_65 = arith.constant dense<0.000000e+00> : vector<16x32xf32>
    %137 = tpu.matmul %135, %136, %cst_65 {dimension_numbers = #tpu.dot_dimension_numbers<[1], [0], [0], [1], [0, 0, 1, 1], [], []>} : vector<16x32xf32>, vector<32x32xf32>, vector<16x32xf32> -> vector<16x32xf32>
    %c0_66 = arith.constant 0 : index
    %c0_67 = arith.constant 0 : index
    %138 = vector.load %arg17[%c0_66, %c0_67] : memref<1x32xf32, #tpu.memory_space<vmem>>, vector<1x32xf32>
    %139 = vector.broadcast %138 : vector<1x32xf32> to vector<16x32xf32>
    %140 = arith.addf %137, %139 : vector<16x32xf32>
    %141 = arith.addf %140, %77 : vector<16x32xf32>
    %c0_68 = arith.constant 0 : index
    %c0_69 = arith.constant 0 : index
    %142 = vector.load %arg18[%c0_68, %c0_69] : memref<32x64xf32, #tpu.memory_space<vmem>>, vector<32x64xf32>
    %cst_70 = arith.constant dense<0.000000e+00> : vector<16x64xf32>
    %143 = tpu.matmul %141, %142, %cst_70 {dimension_numbers = #tpu.dot_dimension_numbers<[1], [0], [0], [1], [0, 0, 1, 1], [], []>} : vector<16x32xf32>, vector<32x64xf32>, vector<16x64xf32> -> vector<16x64xf32>
    %c0_71 = arith.constant 0 : index
    %c0_72 = arith.constant 0 : index
    %144 = vector.load %arg19[%c0_71, %c0_72] : memref<1x64xf32, #tpu.memory_space<vmem>>, vector<1x64xf32>
    %145 = vector.broadcast %144 : vector<1x64xf32> to vector<16x64xf32>
    %146 = arith.addf %143, %145 : vector<16x64xf32>
    %cst_73 = arith.constant 0.000000e+00 : f32
    %147 = vector.broadcast %cst_73 : f32 to vector<16x64xf32>
    %148 = arith.maximumf %146, %147 : vector<16x64xf32>
    %c0_74 = arith.constant 0 : index
    %c0_75 = arith.constant 0 : index
    %149 = vector.load %arg20[%c0_74, %c0_75] : memref<64x32xf32, #tpu.memory_space<vmem>>, vector<64x32xf32>
    %cst_76 = arith.constant dense<0.000000e+00> : vector<16x32xf32>
    %150 = tpu.matmul %148, %149, %cst_76 {dimension_numbers = #tpu.dot_dimension_numbers<[1], [0], [0], [1], [0, 0, 1, 1], [], []>} : vector<16x64xf32>, vector<64x32xf32>, vector<16x32xf32> -> vector<16x32xf32>
    %c0_77 = arith.constant 0 : index
    %c0_78 = arith.constant 0 : index
    %151 = vector.load %arg21[%c0_77, %c0_78] : memref<1x32xf32, #tpu.memory_space<vmem>>, vector<1x32xf32>
    %152 = vector.broadcast %151 : vector<1x32xf32> to vector<16x32xf32>
    %153 = arith.addf %150, %152 : vector<16x32xf32>
    %154 = arith.addf %153, %141 : vector<16x32xf32>
    %c0_79 = arith.constant 0 : index
    %c0_80 = arith.constant 0 : index
    %155 = vector.load %arg22[%c0_79, %c0_80] : memref<16x32xf32, #tpu.memory_space<vmem>>, vector<16x32xf32>
    tpu.vector_store %arg22[%c0_79, %c0_80], %154 {strides = array<i32>} : memref<16x32xf32, #tpu.memory_space<vmem>>, vector<16x32xf32>,
    return
  }
}

</mosaic_0001>

<llo_original>
// kernel: tpu_custom_call.1
$region0: #{tpu_custom_call.1}
  #allocation0 [shape = 'u32[]', space=smem, size = 0x4, offset = 0x4, fixed_abs, tag = 'smem constant byte address 0x4 - core index']
  #allocation1 [shape = 'u32[144,128]{1,0:T(1,128)}', space=vmem, size = 0x12000, scoped, tag = 'internal scratch']
  %s0 = inlined_call_operand.hbm [shape: f32[16,32], index: 0, kind: input, shape index: {}]
  %s1 = inlined_call_operand.hbm [shape: f32[16,32], index: 1, kind: input, shape index: {}]
  %s2 = inlined_call_operand.vmem [shape: f32[32,32], index: 2, kind: input, shape index: {}]
  %s3 = inlined_call_operand.vmem [shape: f32[1,32], index: 3, kind: input, shape index: {}]
  %s4 = inlined_call_operand.vmem [shape: f32[32,32], index: 4, kind: input, shape index: {}]
  %s5 = inlined_call_operand.vmem [shape: f32[1,32], index: 5, kind: input, shape index: {}]
  %s6 = inlined_call_operand.vmem [shape: f32[32,32], index: 6, kind: input, shape index: {}]
  %s7 = inlined_call_operand.vmem [shape: f32[1,32], index: 7, kind: input, shape index: {}]
  %s8 = inlined_call_operand.hbm [shape: f32[32,32], index: 8, kind: input, shape index: {}]
  %s9 = inlined_call_operand.vmem [shape: f32[1,32], index: 9, kind: input, shape index: {}]
  %s10 = inlined_call_operand.hbm [shape: f32[32,32], index: 10, kind: input, shape index: {}]
  %s11 = inlined_call_operand.hbm [shape: f32[1,32], index: 11, kind: input, shape index: {}]
  %s12 = inlined_call_operand.hbm [shape: f32[32,32], index: 12, kind: input, shape index: {}]
  %s13 = inlined_call_operand.hbm [shape: f32[1,32], index: 13, kind: input, shape index: {}]
  %s14 = inlined_call_operand.hbm [shape: f32[32,32], index: 14, kind: input, shape index: {}]
  %s15 = inlined_call_operand.hbm [shape: f32[1,32], index: 15, kind: input, shape index: {}]
  %s16 = inlined_call_operand.hbm [shape: f32[32,32], index: 16, kind: input, shape index: {}]
  %s17 = inlined_call_operand.hbm [shape: f32[1,32], index: 17, kind: input, shape index: {}]
  %s18 = inlined_call_operand.hbm [shape: f32[32,64], index: 18, kind: input, shape index: {}]
  %s19 = inlined_call_operand.hbm [shape: f32[1,64], index: 19, kind: input, shape index: {}]
  %s20 = inlined_call_operand.vmem [shape: f32[64,32], index: 20, kind: input, shape index: {}]
  %s21 = inlined_call_operand.vmem [shape: f32[1,32], index: 21, kind: input, shape index: {}]
  %s22 = inlined_call_operand.hbm [shape: f32[16,32], index: 22, kind: output, shape index: {0}]
  %s23 = inlined_call_operand.hbm [shape: f32[4,8,8], index: 23, kind: output, shape index: {1}]
  %s24 = inlined_call_operand.hbm [shape: f32[4,8,8], index: 24, kind: output, shape index: {2}]
  %25 = xla_tuple %s22, %s23, %s24
  %s26 = sld [smem:[#allocation0]]
  $region166: #{tpu_custom_call.1} parent=0
    _
  %s28 = ssub.s32 1, %s26
  %s29 = scalar_select 0, %s28, %s26
  $region1: #{tpu_custom_call.1} parent=0
    #allocation2 [shape = 'u8[8192]{0}', space=vmem, size = 0x2000, scoped, tag = 'input window, operand 0, single buffered']
    #allocation3 [shape = 's32[1]{0}', space=sflag, size = 0x4, scoped, tag = 'scoped memory for tpu_custom_call.1']
    #allocation4 [shape = 's32[1]{0}', space=sflag, size = 0x4, scoped, tag = 'scoped memory for tpu_custom_call.1']
    #allocation5 [shape = 'u8[8192]{0}', space=vmem, size = 0x2000, scoped, tag = 'input window, operand 1, single buffered']
    #allocation6 [shape = 's32[1]{0}', space=sflag, size = 0x4, scoped, tag = 'scoped memory for tpu_custom_call.1']
    #allocation7 [shape = 'u8[16384]{0}', space=vmem, size = 0x4000, scoped, tag = 'input window, operand 8, single buffered']
    #allocation8 [shape = 'u8[16384]{0}', space=vmem, size = 0x4000, scoped, tag = 'input window, operand 10, single buffered']
    #allocation9 [shape = 's32[1]{0}', space=sflag, size = 0x4, scoped, tag = 'scoped memory for tpu_custom_call.1']
    #allocation10 [shape = 'u8[512]{0}', space=vmem, size = 0x400, scoped, tag = 'input window, operand 11, single buffered']
    #allocation11 [shape = 'u8[16384]{0}', space=vmem, size = 0x4000, scoped, tag = 'input window, operand 12, single buffered']
    #allocation12 [shape = 's32[1]{0}', space=sflag, size = 0x4, scoped, tag = 'scoped memory for tpu_custom_call.1']
    #allocation13 [shape = 'u8[512]{0}', space=vmem, size = 0x400, scoped, tag = 'input window, operand 13, single buffered']
    #allocation14 [shape = 'u8[16384]{0}', space=vmem, size = 0x4000, scoped, tag = 'input window, operand 14, single buffered']
    #allocation15 [shape = 's32[1]{0}', space=sflag, size = 0x4, scoped, tag = 'scoped memory for tpu_custom_call.1']
    #allocation16 [shape = 'u8[512]{0}', space=vmem, size = 0x400, scoped, tag = 'input window, operand 15, single buffered']
    #allocation17 [shape = 'u8[16384]{0}', space=vmem, size = 0x4000, scoped, tag = 'input window, operand 16, single buffered']
    #allocation18 [shape = 's32[1]{0}', space=sflag, size = 0x4, scoped, tag = 'scoped memory for tpu_custom_call.1']
    #allocation19 [shape = 'u8[512]{0}', space=vmem, size = 0x400, scoped, tag = 'input window, operand 17, single buffered']
    #allocation20 [shape = 'u8[16384]{0}', space=vmem, size = 0x4000, scoped, tag = 'input window, operand 18, single buffered']
    #allocation21 [shape = 's32[1]{0}', space=sflag, size = 0x4, scoped, tag = 'scoped memory for tpu_custom_call.1']
    #allocation22 [shape = 'u8[512]{0}', space=vmem, size = 0x400, scoped, tag = 'input window, operand 19, single buffered']
    #allocation23 [shape = 'u8[8192]{0}', space=vmem, size = 0x2000, scoped, tag = 'output window, operand 0, single buffered']
    #allocation24 [shape = 'u8[16384]{0}', space=vmem, size = 0x4000, scoped, tag = 'output window, operand 1, single buffered']
    #allocation25 [shape = 's32[1]{0}', space=sflag, size = 0x4, scoped, tag = 'scoped memory for tpu_custom_call.1']
    #allocation26 [shape = 'u8[16384]{0}', space=vmem, size = 0x4000, scoped, tag = 'output window, operand 2, single buffered']
    %30 = vsyncpa [#allocation3], 0
    %31 = vsyncpa [#allocation6], 0
    %32 = vsyncpa [#allocation9], 0
    %33 = vsyncpa [#allocation12], 0
    %34 = vsyncpa [#allocation15], 0
    %35 = vsyncpa [#allocation18], 0
    %36 = vsyncpa [#allocation21], 0
    %37 = vsyncpa [#allocation4], 0
    %38 = vsyncpa [#allocation25], 0
    // Predicated region
    $region2: #{tpu_custom_call.1} parent=1 // pred_check
      _
    $region3: #{tpu_custom_call.1} parent=1 // pred_check_branch
      %40 = sbr.rel (0) target = $region5
    $region4: #{tpu_custom_call.1} parent=1 // pred_region
      %s42 = ssub.s32 256, 256
      %43 = vsyncadd [#allocation3], %s42
      %s44 = sshll.u32 [#allocation2], 4
      %s45 = int_to_ptr.vmem [resolvable:$true] %s44
      %50 = dma.hbm_to_vmem [thread:$0]  %s0, 256, %s45, [#allocation3], 128, 128, 8
    $region5: #{tpu_custom_call.1} parent=1 // pred_fallthru
      _
    // Predicated region
    $region6: #{tpu_custom_call.1} parent=1 // pred_check
      _
    $region7: #{tpu_custom_call.1} parent=1 // pred_check_branch
      %52 = sbr.rel (0) target = $region9
    $region8: #{tpu_custom_call.1} parent=1 // pred_region
      %s54 = ssub.s32 256, 256
      %55 = vsyncadd [#allocation6], %s54
      %s56 = sshll.u32 [#allocation5], 4
      %s57 = int_to_ptr.vmem [resolvable:$true] %s56
      %62 = dma.hbm_to_vmem [thread:$0]  %s1, 256, %s57, [#allocation6], 128, 128, 8
    $region9: #{tpu_custom_call.1} parent=1 // pred_fallthru
      _
    // Predicated region
    $region10: #{tpu_custom_call.1} parent=1 // pred_check
      _
    $region11: #{tpu_custom_call.1} parent=1 // pred_check_branch
      %64 = sbr.rel (0) target = $region13
    $region12: #{tpu_custom_call.1} parent=1 // pred_region
      _
    $region13: #{tpu_custom_call.1} parent=1 // pred_fallthru
      _
    // Predicated region
    $region14: #{tpu_custom_call.1} parent=1 // pred_check
      _
    $region15: #{tpu_custom_call.1} parent=1 // pred_check_branch
      %66 = sbr.rel (0) target = $region17
    $region16: #{tpu_custom_call.1} parent=1 // pred_region
      _
    $region17: #{tpu_custom_call.1} parent=1 // pred_fallthru
      _
    // Predicated region
    $region18: #{tpu_custom_call.1} parent=1 // pred_check
      _
    $region19: #{tpu_custom_call.1} parent=1 // pred_check_branch
      %68 = sbr.rel (0) target = $region21
    $region20: #{tpu_custom_call.1} parent=1 // pred_region
      _
    $region21: #{tpu_custom_call.1} parent=1 // pred_fallthru
      _
    // Predicated region
    $region22: #{tpu_custom_call.1} parent=1 // pred_check
      _
    $region23: #{tpu_custom_call.1} parent=1 // pred_check_branch
      %70 = sbr.rel (0) target = $region25
    $region24: #{tpu_custom_call.1} parent=1 // pred_region
      _
    $region25: #{tpu_custom_call.1} parent=1 // pred_fallthru
      _
    // Predicated region
    $region26: #{tpu_custom_call.1} parent=1 // pred_check
      _
    $region27: #{tpu_custom_call.1} parent=1 // pred_check_branch
      %72 = sbr.rel (0) target = $region29
    $region28: #{tpu_custom_call.1} parent=1 // pred_region
      _
    $region29: #{tpu_custom_call.1} parent=1 // pred_fallthru
      _
    // Predicated region
    $region30: #{tpu_custom_call.1} parent=1 // pred_check
      _
    $region31: #{tpu_custom_call.1} parent=1 // pred_check_branch
      %74 = sbr.rel (0) target = $region33
    $region32: #{tpu_custom_call.1} parent=1 // pred_region
      _
    $region33: #{tpu_custom_call.1} parent=1 // pred_fallthru
      _
    // Predicated region
    $region34: #{tpu_custom_call.1} parent=1 // pred_check
      _
    $region35: #{tpu_custom_call.1} parent=1 // pred_check_branch
      %76 = sbr.rel (0) target = $region37
    $region36: #{tpu_custom_call.1} parent=1 // pred_region
      %s78 = ssub.s32 512, 512
      %79 = vsyncadd [#allocation6], %s78
      %s80 = sshll.u32 [#allocation7], 4
      %s81 = int_to_ptr.vmem [resolvable:$true] %s80
      %86 = dma.hbm_to_vmem [thread:$0]  %s8, 512, %s81, [#allocation6], 128, 128, 8
    $region37: #{tpu_custom_call.1} parent=1 // pred_fallthru
      _
    // Predicated region
    $region38: #{tpu_custom_call.1} parent=1 // pred_check
      _
    $region39: #{tpu_custom_call.1} parent=1 // pred_check_branch
      %88 = sbr.rel (0) target = $region41
    $region40: #{tpu_custom_call.1} parent=1 // pred_region
      _
    $region41: #{tpu_custom_call.1} parent=1 // pred_fallthru
      _
    // Predicated region
    $region42: #{tpu_custom_call.1} parent=1 // pred_check
      _
    $region43: #{tpu_custom_call.1} parent=1 // pred_check_branch
      %90 = sbr.rel (0) target = $region45
    $region44: #{tpu_custom_call.1} parent=1 // pred_region
      %s92 = ssub.s32 512, 512
      %93 = vsyncadd [#allocation9], %s92
      %s94 = sshll.u32 [#allocation8], 4
      %s95 = int_to_ptr.vmem [resolvable:$true] %s94
      %100 = dma.hbm_to_vmem [thread:$0]  %s10, 512, %s95, [#allocation9], 128, 128, 8
    $region45: #{tpu_custom_call.1} parent=1 // pred_fallthru
      _
    // Predicated region
    $region46: #{tpu_custom_call.1} parent=1 // pred_check
      _
    $region47: #{tpu_custom_call.1} parent=1 // pred_check_branch
      %102 = sbr.rel (0) target = $region49
    $region48: #{tpu_custom_call.1} parent=1 // pred_region
      %s104 = ssub.s32 16, 16
      %105 = vsyncadd [#allocation9], %s104
      %s107 = sshll.u32 [#allocation10], 4
      %s108 = int_to_ptr.vmem [resolvable:$true] %s107
      %110 = dma.hbm_to_vmem [thread:$0]  %s11, 16, %s108, [#allocation9]
    $region49: #{tpu_custom_call.1} parent=1 // pred_fallthru
      _
    // Predicated region
    $region50: #{tpu_custom_call.1} parent=1 // pred_check
      _
    $region51: #{tpu_custom_call.1} parent=1 // pred_check_branch
      %112 = sbr.rel (0) target = $region53
    $region52: #{tpu_custom_call.1} parent=1 // pred_region
      %s114 = ssub.s32 512, 512
      %115 = vsyncadd [#allocation12], %s114
      %s116 = sshll.u32 [#allocation11], 4
      %s117 = int_to_ptr.vmem [resolvable:$true] %s116
      %122 = dma.hbm_to_vmem [thread:$0]  %s12, 512, %s117, [#allocation12], 128, 128, 8
    $region53: #{tpu_custom_call.1} parent=1 // pred_fallthru
      _
    // Predicated region
    $region54: #{tpu_custom_call.1} parent=1 // pred_check
      _
    $region55: #{tpu_custom_call.1} parent=1 // pred_check_branch
      %124 = sbr.rel (0) target = $region57
    $region56: #{tpu_custom_call.1} parent=1 // pred_region
      %s126 = ssub.s32 16, 16
      %127 = vsyncadd [#allocation12], %s126
      %s129 = sshll.u32 [#allocation13], 4
      %s130 = int_to_ptr.vmem [resolvable:$true] %s129
      %132 = dma.hbm_to_vmem [thread:$0]  %s13, 16, %s130, [#allocation12]
    $region57: #{tpu_custom_call.1} parent=1 // pred_fallthru
      _
    // Predicated region
    $region58: #{tpu_custom_call.1} parent=1 // pred_check
      _
    $region59: #{tpu_custom_call.1} parent=1 // pred_check_branch
      %134 = sbr.rel (0) target = $region61
    $region60: #{tpu_custom_call.1} parent=1 // pred_region
      %s136 = ssub.s32 512, 512
      %137 = vsyncadd [#allocation15], %s136
      %s138 = sshll.u32 [#allocation14], 4
      %s139 = int_to_ptr.vmem [resolvable:$true] %s138
      %144 = dma.hbm_to_vmem [thread:$0]  %s14, 512, %s139, [#allocation15], 128, 128, 8
    $region61: #{tpu_custom_call.1} parent=1 // pred_fallthru
      _
    // Predicated region
    $region62: #{tpu_custom_call.1} parent=1 // pred_check
      _
    $region63: #{tpu_custom_call.1} parent=1 // pred_check_branch
      %146 = sbr.rel (0) target = $region65
    $region64: #{tpu_custom_call.1} parent=1 // pred_region
      %s148 = ssub.s32 16, 16
      %149 = vsyncadd [#allocation15], %s148
      %s151 = sshll.u32 [#allocation16], 4
      %s152 = int_to_ptr.vmem [resolvable:$true] %s151
      %154 = dma.hbm_to_vmem [thread:$0]  %s15, 16, %s152, [#allocation15]
    $region65: #{tpu_custom_call.1} parent=1 // pred_fallthru
      _
    // Predicated region
    $region66: #{tpu_custom_call.1} parent=1 // pred_check
      _
    $region67: #{tpu_custom_call.1} parent=1 // pred_check_branch
      %156 = sbr.rel (0) target = $region69
    $region68: #{tpu_custom_call.1} parent=1 // pred_region
      %s158 = ssub.s32 512, 512
      %159 = vsyncadd [#allocation18], %s158
      %s160 = sshll.u32 [#allocation17], 4
      %s161 = int_to_ptr.vmem [resolvable:$true] %s160
      %166 = dma.hbm_to_vmem [thread:$0]  %s16, 512, %s161, [#allocation18], 128, 128, 8
    $region69: #{tpu_custom_call.1} parent=1 // pred_fallthru
      _
    // Predicated region
    $region70: #{tpu_custom_call.1} parent=1 // pred_check
      _
    $region71: #{tpu_custom_call.1} parent=1 // pred_check_branch
      %168 = sbr.rel (0) target = $region73
    $region72: #{tpu_custom_call.1} parent=1 // pred_region
      %s170 = ssub.s32 16, 16
      %171 = vsyncadd [#allocation18], %s170
      %s173 = sshll.u32 [#allocation19], 4
      %s174 = int_to_ptr.vmem [resolvable:$true] %s173
      %176 = dma.hbm_to_vmem [thread:$0]  %s17, 16, %s174, [#allocation18]
    $region73: #{tpu_custom_call.1} parent=1 // pred_fallthru
      _
    // Predicated region
    $region74: #{tpu_custom_call.1} parent=1 // pred_check
      _
    $region75: #{tpu_custom_call.1} parent=1 // pred_check_branch
      %178 = sbr.rel (0) target = $region77
    $region76: #{tpu_custom_call.1} parent=1 // pred_region
      %s180 = ssub.s32 512, 512
      %181 = vsyncadd [#allocation21], %s180
      %s182 = sshll.u32 [#allocation20], 4
      %s183 = int_to_ptr.vmem [resolvable:$true] %s182
      %188 = dma.hbm_to_vmem [thread:$0]  %s18, 512, %s183, [#allocation21], 128, 128, 8
    $region77: #{tpu_custom_call.1} parent=1 // pred_fallthru
      _
    // Predicated region
    $region78: #{tpu_custom_call.1} parent=1 // pred_check
      _
    $region79: #{tpu_custom_call.1} parent=1 // pred_check_branch
      %190 = sbr.rel (0) target = $region81
    $region80: #{tpu_custom_call.1} parent=1 // pred_region
      %s192 = ssub.s32 16, 16
      %193 = vsyncadd [#allocation21], %s192
      %s195 = sshll.u32 [#allocation22], 4
      %s196 = int_to_ptr.vmem [resolvable:$true] %s195
      %198 = dma.hbm_to_vmem [thread:$0]  %s19, 16, %s196, [#allocation21]
    $region81: #{tpu_custom_call.1} parent=1 // pred_fallthru
      _
    // Predicated region
    $region82: #{tpu_custom_call.1} parent=1 // pred_check
      _
    $region83: #{tpu_custom_call.1} parent=1 // pred_check_branch
      %200 = sbr.rel (0) target = $region85
    $region84: #{tpu_custom_call.1} parent=1 // pred_region
      _
    $region85: #{tpu_custom_call.1} parent=1 // pred_fallthru
      _
    // Predicated region
    $region86: #{tpu_custom_call.1} parent=1 // pred_check
      _
    $region87: #{tpu_custom_call.1} parent=1 // pred_check_branch
      %202 = sbr.rel (0) target = $region89
    $region88: #{tpu_custom_call.1} parent=1 // pred_region
      _
    $region89: #{tpu_custom_call.1} parent=1 // pred_fallthru
      _
    // Predicated region
    $region90: #{tpu_custom_call.1} parent=1 // pred_check
      _
    $region91: #{tpu_custom_call.1} parent=1 // pred_check_branch
      %204 = sbr.rel (0) target = $region93
    $region92: #{tpu_custom_call.1} parent=1 // pred_region
      %205 = dma.done [#allocation3], 256
    $region93: #{tpu_custom_call.1} parent=1 // pred_fallthru
      _
    // Predicated region
    $region94: #{tpu_custom_call.1} parent=1 // pred_check
      _
    $region95: #{tpu_custom_call.1} parent=1 // pred_check_branch
      %207 = sbr.rel (0) target = $region97
    $region96: #{tpu_custom_call.1} parent=1 // pred_region
      %208 = dma.done [#allocation6], 256
    $region97: #{tpu_custom_call.1} parent=1 // pred_fallthru
      _
    // Predicated region
    $region98: #{tpu_custom_call.1} parent=1 // pred_check
      _
    $region99: #{tpu_custom_call.1} parent=1 // pred_check_branch
      %210 = sbr.rel (0) target = $region101
    $region100: #{tpu_custom_call.1} parent=1 // pred_region
      %211 = dma.done [#allocation6], 512
    $region101: #{tpu_custom_call.1} parent=1 // pred_fallthru
      _
    // Predicated region
    $region102: #{tpu_custom_call.1} parent=1 // pred_check
      _
    $region103: #{tpu_custom_call.1} parent=1 // pred_check_branch
      %213 = sbr.rel (0) target = $region105
    $region104: #{tpu_custom_call.1} parent=1 // pred_region
      %214 = dma.done [#allocation9], 512
    $region105: #{tpu_custom_call.1} parent=1 // pred_fallthru
      _
    // Predicated region
    $region106: #{tpu_custom_call.1} parent=1 // pred_check
      _
    $region107: #{tpu_custom_call.1} parent=1 // pred_check_branch
      %216 = sbr.rel (0) target = $region109
    $region108: #{tpu_custom_call.1} parent=1 // pred_region
      %217 = dma.done [#allocation9], 16
    $region109: #{tpu_custom_call.1} parent=1 // pred_fallthru
      _
    // Predicated region
    $region110: #{tpu_custom_call.1} parent=1 // pred_check
      _
    $region111: #{tpu_custom_call.1} parent=1 // pred_check_branch
      %219 = sbr.rel (0) target = $region113
    $region112: #{tpu_custom_call.1} parent=1 // pred_region
      %220 = dma.done [#allocation12], 512
    $region113: #{tpu_custom_call.1} parent=1 // pred_fallthru
      _
    // Predicated region
    $region114: #{tpu_custom_call.1} parent=1 // pred_check
      _
    $region115: #{tpu_custom_call.1} parent=1 // pred_check_branch
      %222 = sbr.rel (0) target = $region117
    $region116: #{tpu_custom_call.1} parent=1 // pred_region
      %223 = dma.done [#allocation12], 16
    $region117: #{tpu_custom_call.1} parent=1 // pred_fallthru
      _
    // Predicated region
    $region118: #{tpu_custom_call.1} parent=1 // pred_check
      _
    $region119: #{tpu_custom_call.1} parent=1 // pred_check_branch
      %225 = sbr.rel (0) target = $region121
    $region120: #{tpu_custom_call.1} parent=1 // pred_region
      %226 = dma.done [#allocation15], 512
    $region121: #{tpu_custom_call.1} parent=1 // pred_fallthru
      _
    // Predicated region
    $region122: #{tpu_custom_call.1} parent=1 // pred_check
      _
    $region123: #{tpu_custom_call.1} parent=1 // pred_check_branch
      %228 = sbr.rel (0) target = $region125
    $region124: #{tpu_custom_call.1} parent=1 // pred_region
      %229 = dma.done [#allocation15], 16
    $region125: #{tpu_custom_call.1} parent=1 // pred_fallthru
      _
    // Predicated region
    $region126: #{tpu_custom_call.1} parent=1 // pred_check
      _
    $region127: #{tpu_custom_call.1} parent=1 // pred_check_branch
      %231 = sbr.rel (0) target = $region129
    $region128: #{tpu_custom_call.1} parent=1 // pred_region
      %232 = dma.done [#allocation18], 512
    $region129: #{tpu_custom_call.1} parent=1 // pred_fallthru
      _
    // Predicated region
    $region130: #{tpu_custom_call.1} parent=1 // pred_check
      _
    $region131: #{tpu_custom_call.1} parent=1 // pred_check_branch
      %234 = sbr.rel (0) target = $region133
    $region132: #{tpu_custom_call.1} parent=1 // pred_region
      %235 = dma.done [#allocation18], 16
    $region133: #{tpu_custom_call.1} parent=1 // pred_fallthru
      _
    // Predicated region
    $region134: #{tpu_custom_call.1} parent=1 // pred_check
      _
    $region135: #{tpu_custom_call.1} parent=1 // pred_check_branch
      %237 = sbr.rel (0) target = $region137
    $region136: #{tpu_custom_call.1} parent=1 // pred_region
      %238 = dma.done [#allocation21], 512
    $region137: #{tpu_custom_call.1} parent=1 // pred_fallthru
      _
    // Predicated region
    $region138: #{tpu_custom_call.1} parent=1 // pred_check
      _
    $region139: #{tpu_custom_call.1} parent=1 // pred_check_branch
      %240 = sbr.rel (0) target = $region141
    $region140: #{tpu_custom_call.1} parent=1 // pred_region
      %241 = dma.done [#allocation21], 16
    $region141: #{tpu_custom_call.1} parent=1 // pred_fallthru
      _
    %v242 = vld [vmem:[#allocation2] sm:$0xff]
    %v243 = vld [vmem:[#allocation2 + $0x8] sm:$0xff]
    %v244 = vld [vmem:[#allocation5] sm:$0xff]
    %v245 = vld [vmem:[#allocation5 + $0x8] sm:$0xff]
    %v246 = vlaneseq
    %v247 = vshrl.u32 %v246, 7
    %v248 = vlaneseq
    %v249 = vand.u32 %v248, 127
    %vm250 = vcmp.gt.s32.totalorder %v249, %v247
    %v251 = vld [vmem:[%s2] sm:$0xff]
    %v252 = vld [vmem:[%s2 + $0x8] sm:$0xff]
    %v253 = vld [vmem:[%s2 + $0x10] sm:$0xff]
    %v254 = vld [vmem:[%s2 + $0x18] sm:$0xff]
    %v255 = vld [vmem:[%s3] sm:$0x1]
    %v257 = vlaneseq
    %v258 = vshrl.u32 %v257, 7
    %v259 = vsub.s32 0, %v258
    %v260 = vrot.slane %v255, %v259
    %vm262 = vcmask 261120
    %v264 = vsel %vm262, %v242, 0
    %v267 = vsel %vm262, %v243, 0
    %269 = vmatprep.subr.mxu0 0.0
    %270 = vmatpush1.msra.mxu0 0.0
    %271 = vmatprep.subr.mxu0 0.0
    %272 = vmatpush1.msra.mxu0 0.0
    %273 = vmatprep.subr.mxu0 0.0
    %274 = vmatpush1.msra.mxu0 0.0
    %275 = vmatprep.subr.mxu0 0.0
    %276 = vmatpush1.msra.mxu0 0.0
    %277 = vmatprep.subr.mxu0 0.0
    %278 = vmatpush1.msra.mxu0 0.0
    %279 = vmatprep.subr.mxu0 0.0
    %280 = vmatpush1.msra.mxu0 0.0
    %281 = vmatprep.subr.mxu0 0.0
    %282 = vmatpush1.msra.mxu0 0.0
    %283 = vmatprep.subr.mxu0 0.0
    %284 = vmatpush1.msra.mxu0 0.0
    %285 = vmatprep.subr.mxu0 0.0
    %286 = vmatpush1.msra.mxu0 0.0
    %287 = vmatprep.subr.mxu0 0.0
    %288 = vmatpush1.msra.mxu0 0.0
    %289 = vmatprep.subr.mxu0 0.0
    %290 = vmatpush1.msra.mxu0 0.0
    %291 = vmatprep.subr.mxu0 0.0
    %292 = vmatpush1.msra.mxu0 0.0
    %293 = vmatprep.subr.mxu0 0.0
    %294 = vmatpush1.msra.mxu0 %v254
    %295 = vmatprep.subr.mxu0 0.0
    %296 = vmatpush1.msra.mxu0 %v253
    %297 = vmatprep.subr.mxu0 0.0
    %298 = vmatpush1.msra.mxu0 %v252
    %299 = vmatprep.subr.mxu0 0.0
    %300 = vmatpush1.msra.mxu0 %v251
    %301 = vmatprep.subr.mxu0 0.0
    %302 = vmatpush2.msra.mxu0 0.0
    %303 = vmatprep.subr.mxu0 0.0
    %304 = vmatpush2.msra.mxu0 0.0
    %305 = vmatprep.subr.mxu0 0.0
    %306 = vmatpush2.msra.mxu0 0.0
    %307 = vmatprep.subr.mxu0 0.0
    %308 = vmatpush2.msra.mxu0 0.0
    %309 = vmatprep.subr.mxu0 0.0
    %310 = vmatpush2.msra.mxu0 0.0
    %311 = vmatprep.subr.mxu0 0.0
    %312 = vmatpush2.msra.mxu0 0.0
    %313 = vmatprep.subr.mxu0 0.0
    %314 = vmatpush2.msra.mxu0 0.0
    %315 = vmatprep.subr.mxu0 0.0
    %316 = vmatpush2.msra.mxu0 0.0
    %317 = vmatprep.subr.mxu0 0.0
    %318 = vmatpush2.msra.mxu0 0.0
    %319 = vmatprep.subr.mxu0 0.0
    %320 = vmatpush2.msra.mxu0 0.0
    %321 = vmatprep.subr.mxu0 0.0
    %322 = vmatpush2.msra.mxu0 0.0
    %323 = vmatprep.subr.mxu0 0.0
    %324 = vmatpush2.msra.mxu0 0.0
    %325 = vmatprep.subr.mxu0 0.0
    %326 = vmatpush2.msra.mxu0 0.0
    %327 = vmatprep.subr.mxu0 0.0
    %328 = vmatpush2.msra.mxu0 0.0
    %329 = vmatprep.subr.mxu0 0.0
    %330 = vmatpush2.msra.mxu0 0.0
    %331 = vmatprep.subr.mxu0 0.0
    %332 = vmatpush2.msra.mxu0 0.0
    %333 = vmatprep.mubr.f32.mxu0 0.0
    %334 = vmatmul.mubr.f32.gmra.mxu0 %v264
    %v335 = vpop.f32.mrf.mxu0
    %v336 = vadd.f32 %v260, %v335
    %v337 = vpop.f32.mrf.mxu0
    %338 = vmatprep.mubr.f32.mxu0 0.0
    %339 = vmatmul.mubr.f32.gmra.mxu0 %v267
    %v340 = vpop.f32.mrf.mxu0
    %v341 = vadd.f32 %v260, %v340
    %v342 = vpop.f32.mrf.mxu0
    %343 = vdwg.mxu0
    %v344 = vmul.f32 %v336, 0.25
    %v345 = vmul.f32 %v341, 0.25
    %v346 = vld [vmem:[%s4] sm:$0xff]
    %v347 = vld [vmem:[%s4 + $0x8] sm:$0xff]
    %v348 = vld [vmem:[%s4 + $0x10] sm:$0xff]
    %v349 = vld [vmem:[%s4 + $0x18] sm:$0xff]
    %v350 = vld [vmem:[%s5] sm:$0x1]
    %v352 = vlaneseq
    %v353 = vshrl.u32 %v352, 7
    %v354 = vsub.s32 0, %v353
    %v355 = vrot.slane %v350, %v354
    %357 = vmatprep.subr.mxu0 0.0
    %358 = vmatpush1.msra.mxu0 0.0
    %359 = vmatprep.subr.mxu0 0.0
    %360 = vmatpush1.msra.mxu0 0.0
    %361 = vmatprep.subr.mxu0 0.0
    %362 = vmatpush1.msra.mxu0 0.0
    %363 = vmatprep.subr.mxu0 0.0
    %364 = vmatpush1.msra.mxu0 0.0
    %365 = vmatprep.subr.mxu0 0.0
    %366 = vmatpush1.msra.mxu0 0.0
    %367 = vmatprep.subr.mxu0 0.0
    %368 = vmatpush1.msra.mxu0 0.0
    %369 = vmatprep.subr.mxu0 0.0
    %370 = vmatpush1.msra.mxu0 0.0
    %371 = vmatprep.subr.mxu0 0.0
    %372 = vmatpush1.msra.mxu0 0.0
    %373 = vmatprep.subr.mxu0 0.0
    %374 = vmatpush1.msra.mxu0 0.0
    %375 = vmatprep.subr.mxu0 0.0
    %376 = vmatpush1.msra.mxu0 0.0
    %377 = vmatprep.subr.mxu0 0.0
    %378 = vmatpush1.msra.mxu0 0.0
    %379 = vmatprep.subr.mxu0 0.0
    %380 = vmatpush1.msra.mxu0 0.0
    %381 = vmatprep.subr.mxu0 0.0
    %382 = vmatpush1.msra.mxu0 %v349
    %383 = vmatprep.subr.mxu0 0.0
    %384 = vmatpush1.msra.mxu0 %v348
    %385 = vmatprep.subr.mxu0 0.0
    %386 = vmatpush1.msra.mxu0 %v347
    %387 = vmatprep.subr.mxu0 0.0
    %388 = vmatpush1.msra.mxu0 %v346
    %389 = vmatprep.subr.mxu0 0.0
    %390 = vmatpush2.msra.mxu0 0.0
    %391 = vmatprep.subr.mxu0 0.0
    %392 = vmatpush2.msra.mxu0 0.0
    %393 = vmatprep.subr.mxu0 0.0
    %394 = vmatpush2.msra.mxu0 0.0
    %395 = vmatprep.subr.mxu0 0.0
    %396 = vmatpush2.msra.mxu0 0.0
    %397 = vmatprep.subr.mxu0 0.0
    %398 = vmatpush2.msra.mxu0 0.0
    %399 = vmatprep.subr.mxu0 0.0
    %400 = vmatpush2.msra.mxu0 0.0
    %401 = vmatprep.subr.mxu0 0.0
    %402 = vmatpush2.msra.mxu0 0.0
    %403 = vmatprep.subr.mxu0 0.0
    %404 = vmatpush2.msra.mxu0 0.0
    %405 = vmatprep.subr.mxu0 0.0
    %406 = vmatpush2.msra.mxu0 0.0
    %407 = vmatprep.subr.mxu0 0.0
    %408 = vmatpush2.msra.mxu0 0.0
    %409 = vmatprep.subr.mxu0 0.0
    %410 = vmatpush2.msra.mxu0 0.0
    %411 = vmatprep.subr.mxu0 0.0
    %412 = vmatpush2.msra.mxu0 0.0
    %413 = vmatprep.subr.mxu0 0.0
    %414 = vmatpush2.msra.mxu0 0.0
    %415 = vmatprep.subr.mxu0 0.0
    %416 = vmatpush2.msra.mxu0 0.0
    %417 = vmatprep.subr.mxu0 0.0
    %418 = vmatpush2.msra.mxu0 0.0
    %419 = vmatprep.subr.mxu0 0.0
    %420 = vmatpush2.msra.mxu0 0.0
    %421 = vmatprep.mubr.f32.mxu0 0.0
    %422 = vmatmul.mubr.f32.gmra.mxu0 %v264
    %v423 = vpop.f32.mrf.mxu0
    %v424 = vadd.f32 %v355, %v423
    %v425 = vpop.f32.mrf.mxu0
    %426 = vmatprep.mubr.f32.mxu0 0.0
    %427 = vmatmul.mubr.f32.gmra.mxu0 %v267
    %v428 = vpop.f32.mrf.mxu0
    %v429 = vadd.f32 %v355, %v428
    %v430 = vpop.f32.mrf.mxu0
    %431 = vdwg.mxu0
    %v432 = vld [vmem:[%s6] sm:$0xff]
    %v433 = vld [vmem:[%s6 + $0x8] sm:$0xff]
    %v434 = vld [vmem:[%s6 + $0x10] sm:$0xff]
    %v435 = vld [vmem:[%s6 + $0x18] sm:$0xff]
    %v436 = vld [vmem:[%s7] sm:$0x1]
    %v438 = vlaneseq
    %v439 = vshrl.u32 %v438, 7
    %v440 = vsub.s32 0, %v439
    %v441 = vrot.slane %v436, %v440
    %443 = vmatprep.subr.mxu0 0.0
    %444 = vmatpush1.msra.mxu0 0.0
    %445 = vmatprep.subr.mxu0 0.0
    %446 = vmatpush1.msra.mxu0 0.0
    %447 = vmatprep.subr.mxu0 0.0
    %448 = vmatpush1.msra.mxu0 0.0
    %449 = vmatprep.subr.mxu0 0.0
    %450 = vmatpush1.msra.mxu0 0.0
    %451 = vmatprep.subr.mxu0 0.0
    %452 = vmatpush1.msra.mxu0 0.0
    %453 = vmatprep.subr.mxu0 0.0
    %454 = vmatpush1.msra.mxu0 0.0
    %455 = vmatprep.subr.mxu0 0.0
    %456 = vmatpush1.msra.mxu0 0.0
    %457 = vmatprep.subr.mxu0 0.0
    %458 = vmatpush1.msra.mxu0 0.0
    %459 = vmatprep.subr.mxu0 0.0
    %460 = vmatpush1.msra.mxu0 0.0
    %461 = vmatprep.subr.mxu0 0.0
    %462 = vmatpush1.msra.mxu0 0.0
    %463 = vmatprep.subr.mxu0 0.0
    %464 = vmatpush1.msra.mxu0 0.0
    %465 = vmatprep.subr.mxu0 0.0
    %466 = vmatpush1.msra.mxu0 0.0
    %467 = vmatprep.subr.mxu0 0.0
    %468 = vmatpush1.msra.mxu0 %v435
    %469 = vmatprep.subr.mxu0 0.0
    %470 = vmatpush1.msra.mxu0 %v434
    %471 = vmatprep.subr.mxu0 0.0
    %472 = vmatpush1.msra.mxu0 %v433
    %473 = vmatprep.subr.mxu0 0.0
    %474 = vmatpush1.msra.mxu0 %v432
    %475 = vmatprep.subr.mxu0 0.0
    %476 = vmatpush2.msra.mxu0 0.0
    %477 = vmatprep.subr.mxu0 0.0
    %478 = vmatpush2.msra.mxu0 0.0
    %479 = vmatprep.subr.mxu0 0.0
    %480 = vmatpush2.msra.mxu0 0.0
    %481 = vmatprep.subr.mxu0 0.0
    %482 = vmatpush2.msra.mxu0 0.0
    %483 = vmatprep.subr.mxu0 0.0
    %484 = vmatpush2.msra.mxu0 0.0
    %485 = vmatprep.subr.mxu0 0.0
    %486 = vmatpush2.msra.mxu0 0.0
    %487 = vmatprep.subr.mxu0 0.0
    %488 = vmatpush2.msra.mxu0 0.0
    %489 = vmatprep.subr.mxu0 0.0
    %490 = vmatpush2.msra.mxu0 0.0
    %491 = vmatprep.subr.mxu0 0.0
    %492 = vmatpush2.msra.mxu0 0.0
    %493 = vmatprep.subr.mxu0 0.0
    %494 = vmatpush2.msra.mxu0 0.0
    %495 = vmatprep.subr.mxu0 0.0
    %496 = vmatpush2.msra.mxu0 0.0
    %497 = vmatprep.subr.mxu0 0.0
    %498 = vmatpush2.msra.mxu0 0.0
    %499 = vmatprep.subr.mxu0 0.0
    %500 = vmatpush2.msra.mxu0 0.0
    %501 = vmatprep.subr.mxu0 0.0
    %502 = vmatpush2.msra.mxu0 0.0
    %503 = vmatprep.subr.mxu0 0.0
    %504 = vmatpush2.msra.mxu0 0.0
    %505 = vmatprep.subr.mxu0 0.0
    %506 = vmatpush2.msra.mxu0 0.0
    %507 = vmatprep.mubr.f32.mxu0 0.0
    %508 = vmatmul.mubr.f32.gmra.mxu0 %v264
    %v509 = vpop.f32.mrf.mxu0
    %v510 = vadd.f32 %v441, %v509
    %v511 = vpop.f32.mrf.mxu0
    %512 = vmatprep.mubr.f32.mxu0 0.0
    %513 = vmatmul.mubr.f32.gmra.mxu0 %v267
    %v514 = vpop.f32.mrf.mxu0
    %v515 = vadd.f32 %v441, %v514
    %v516 = vpop.f32.mrf.mxu0
    %517 = vdwg.mxu0
    %vm518 = vcmask 130048
    %v520 = vsel %vm518, %v344, 0
    %v523 = vsel %vm518, %v424, 0
    %525 = vmatprep.subr.mxu0 0.0
    %526 = vmatpush1.xpose.msra.mxu0 0.0
    %527 = vmatprep.subr.mxu0 0.0
    %528 = vmatpush1.xpose.msra.mxu0 0.0
    %529 = vmatprep.subr.mxu0 0.0
    %530 = vmatpush1.xpose.msra.mxu0 0.0
    %531 = vmatprep.subr.mxu0 0.0
    %532 = vmatpush1.xpose.msra.mxu0 0.0
    %533 = vmatprep.subr.mxu0 0.0
    %534 = vmatpush1.xpose.msra.mxu0 0.0
    %535 = vmatprep.subr.mxu0 0.0
    %536 = vmatpush1.xpose.msra.mxu0 0.0
    %537 = vmatprep.subr.mxu0 0.0
    %538 = vmatpush1.xpose.msra.mxu0 0.0
    %539 = vmatprep.subr.mxu0 0.0
    %540 = vmatpush1.xpose.msra.mxu0 0.0
    %541 = vmatprep.subr.mxu0 0.0
    %542 = vmatpush1.xpose.msra.mxu0 0.0
    %543 = vmatprep.subr.mxu0 0.0
    %544 = vmatpush1.xpose.msra.mxu0 0.0
    %545 = vmatprep.subr.mxu0 0.0
    %546 = vmatpush1.xpose.msra.mxu0 0.0
    %547 = vmatprep.subr.mxu0 0.0
    %548 = vmatpush1.xpose.msra.mxu0 0.0
    %549 = vmatprep.subr.mxu0 0.0
    %550 = vmatpush1.xpose.msra.mxu0 0.0
    %551 = vmatprep.subr.mxu0 0.0
    %552 = vmatpush1.xpose.msra.mxu0 0.0
    %553 = vmatprep.subr.mxu0 0.0
    %554 = vmatpush1.xpose.msra.mxu0 0.0
    %555 = vmatprep.subr.mxu0 0.0
    %556 = vmatpush1.xpose.msra.mxu0 %v523
    %557 = vmatprep.subr.mxu0 0.0
    %558 = vmatpush2.xpose.msra.mxu0 0.0
    %559 = vmatprep.subr.mxu0 0.0
    %560 = vmatpush2.xpose.msra.mxu0 0.0
    %561 = vmatprep.subr.mxu0 0.0
    %562 = vmatpush2.xpose.msra.mxu0 0.0
    %563 = vmatprep.subr.mxu0 0.0
    %564 = vmatpush2.xpose.msra.mxu0 0.0
    %565 = vmatprep.subr.mxu0 0.0
    %566 = vmatpush2.xpose.msra.mxu0 0.0
    %567 = vmatprep.subr.mxu0 0.0
    %568 = vmatpush2.xpose.msra.mxu0 0.0
    %569 = vmatprep.subr.mxu0 0.0
    %570 = vmatpush2.xpose.msra.mxu0 0.0
    %571 = vmatprep.subr.mxu0 0.0
    %572 = vmatpush2.xpose.msra.mxu0 0.0
    %573 = vmatprep.subr.mxu0 0.0
    %574 = vmatpush2.xpose.msra.mxu0 0.0
    %575 = vmatprep.subr.mxu0 0.0
    %576 = vmatpush2.xpose.msra.mxu0 0.0
    %577 = vmatprep.subr.mxu0 0.0
    %578 = vmatpush2.xpose.msra.mxu0 0.0
    %579 = vmatprep.subr.mxu0 0.0
    %580 = vmatpush2.xpose.msra.mxu0 0.0
    %581 = vmatprep.subr.mxu0 0.0
    %582 = vmatpush2.xpose.msra.mxu0 0.0
    %583 = vmatprep.subr.mxu0 0.0
    %584 = vmatpush2.xpose.msra.mxu0 0.0
    %585 = vmatprep.subr.mxu0 0.0
    %586 = vmatpush2.xpose.msra.mxu0 0.0
    %587 = vmatprep.subr.mxu0 0.0
    %588 = vmatpush2.xpose.msra.mxu0 0.0
    %589 = vmatprep.mubr.f32.mxu0 0.0
    %590 = vmatmul.mubr.f32.gmra.mxu0 %v520
    %v591 = vpop.f32.mrf.mxu0
    %v592 = vadd.f32 0.0, %v591
    %v593 = vpop.f32.mrf.mxu0
    %594 = vdwg.mxu0
    %v596 = vsel %vm518, %v345, 0
    %v599 = vsel %vm518, %v429, 0
    %601 = vmatprep.subr.mxu0 0.0
    %602 = vmatpush1.xpose.msra.mxu0 0.0
    %603 = vmatprep.subr.mxu0 0.0
    %604 = vmatpush1.xpose.msra.mxu0 0.0
    %605 = vmatprep.subr.mxu0 0.0
    %606 = vmatpush1.xpose.msra.mxu0 0.0
    %607 = vmatprep.subr.mxu0 0.0
    %608 = vmatpush1.xpose.msra.mxu0 0.0
    %609 = vmatprep.subr.mxu0 0.0
    %610 = vmatpush1.xpose.msra.mxu0 0.0
    %611 = vmatprep.subr.mxu0 0.0
    %612 = vmatpush1.xpose.msra.mxu0 0.0
    %613 = vmatprep.subr.mxu0 0.0
    %614 = vmatpush1.xpose.msra.mxu0 0.0
    %615 = vmatprep.subr.mxu0 0.0
    %616 = vmatpush1.xpose.msra.mxu0 0.0
    %617 = vmatprep.subr.mxu0 0.0
    %618 = vmatpush1.xpose.msra.mxu0 0.0
    %619 = vmatprep.subr.mxu0 0.0
    %620 = vmatpush1.xpose.msra.mxu0 0.0
    %621 = vmatprep.subr.mxu0 0.0
    %622 = vmatpush1.xpose.msra.mxu0 0.0
    %623 = vmatprep.subr.mxu0 0.0
    %624 = vmatpush1.xpose.msra.mxu0 0.0
    %625 = vmatprep.subr.mxu0 0.0
    %626 = vmatpush1.xpose.msra.mxu0 0.0
    %627 = vmatprep.subr.mxu0 0.0
    %628 = vmatpush1.xpose.msra.mxu0 0.0
    %629 = vmatprep.subr.mxu0 0.0
    %630 = vmatpush1.xpose.msra.mxu0 0.0
    %631 = vmatprep.subr.mxu0 0.0
    %632 = vmatpush1.xpose.msra.mxu0 %v599
    %633 = vmatprep.subr.mxu0 0.0
    %634 = vmatpush2.xpose.msra.mxu0 0.0
    %635 = vmatprep.subr.mxu0 0.0
    %636 = vmatpush2.xpose.msra.mxu0 0.0
    %637 = vmatprep.subr.mxu0 0.0
    %638 = vmatpush2.xpose.msra.mxu0 0.0
    %639 = vmatprep.subr.mxu0 0.0
    %640 = vmatpush2.xpose.msra.mxu0 0.0
    %641 = vmatprep.subr.mxu0 0.0
    %642 = vmatpush2.xpose.msra.mxu0 0.0
    %643 = vmatprep.subr.mxu0 0.0
    %644 = vmatpush2.xpose.msra.mxu0 0.0
    %645 = vmatprep.subr.mxu0 0.0
    %646 = vmatpush2.xpose.msra.mxu0 0.0
    %647 = vmatprep.subr.mxu0 0.0
    %648 = vmatpush2.xpose.msra.mxu0 0.0
    %649 = vmatprep.subr.mxu0 0.0
    %650 = vmatpush2.xpose.msra.mxu0 0.0
    %651 = vmatprep.subr.mxu0 0.0
    %652 = vmatpush2.xpose.msra.mxu0 0.0
    %653 = vmatprep.subr.mxu0 0.0
    %654 = vmatpush2.xpose.msra.mxu0 0.0
    %655 = vmatprep.subr.mxu0 0.0
    %656 = vmatpush2.xpose.msra.mxu0 0.0
    %657 = vmatprep.subr.mxu0 0.0
    %658 = vmatpush2.xpose.msra.mxu0 0.0
    %659 = vmatprep.subr.mxu0 0.0
    %660 = vmatpush2.xpose.msra.mxu0 0.0
    %661 = vmatprep.subr.mxu0 0.0
    %662 = vmatpush2.xpose.msra.mxu0 0.0
    %663 = vmatprep.subr.mxu0 0.0
    %664 = vmatpush2.xpose.msra.mxu0 0.0
    %665 = vmatprep.mubr.f32.mxu0 0.0
    %666 = vmatmul.mubr.f32.gmra.mxu0 %v596
    %v667 = vpop.f32.mrf.mxu0
    %v668 = vadd.f32 0.0, %v667
    %v669 = vpop.f32.mrf.mxu0
    %670 = vdwg.mxu0
    %v671 = vsel %vm250, 1, 0
    %vm672 = vcmp.eq.s32.totalorder %v671, 1
    %v673 = vsel %vm672, -1e+09, %v592
    %v674 = vsel %vm672, -1e+09, %v668
    %vm675 = vcmask 64512
    %v676 = vsel %vm675, %v673, -inf
    %677 = vmax.xlane.f32.xlu0 %v676
    %v678 = vpop.xlane.xlu0 %677
    %v679 = vsel %vm675, %v674, -inf
    %680 = vmax.xlane.f32.xlu0 %v679
    %v681 = vpop.xlane.xlu0 %680
    %v682 = vsub.f32 %v673, %v678
    %v683 = vsub.f32 %v674, %v681
    %v684 = vmul.f32 %v682, 1.442695
    %v685 = vpow.pop %v684
    %v686 = vmul.f32 %v683, 1.442695
    %v687 = vpow.pop %v686
    %v688 = vsel %vm675, %v685, 0.0
    %689 = vadd.xlane.f32.xlu0 %v688
    %v690 = vpop.xlane.xlu0 %689
    %v691 = vsel %vm675, %v687, 0.0
    %692 = vadd.xlane.f32.xlu0 %v691
    %v693 = vpop.xlane.xlu0 %692
    %v694 = vrcp.pop %v690
    %v695 = vrcp.pop %v693
    %v696 = vmul.f32 %v685, %v694
    %v697 = vmul.f32 %v687, %v695
    %v699 = vsel %vm675, %v696, 0
    %701 = vmatprep.subr.mxu0 0.0
    %702 = vmatpush1.msra.mxu0 0.0
    %703 = vmatprep.subr.mxu0 0.0
    %704 = vmatpush1.msra.mxu0 0.0
    %705 = vmatprep.subr.mxu0 0.0
    %706 = vmatpush1.msra.mxu0 0.0
    %707 = vmatprep.subr.mxu0 0.0
    %708 = vmatpush1.msra.mxu0 0.0
    %709 = vmatprep.subr.mxu0 0.0
    %710 = vmatpush1.msra.mxu0 0.0
    %711 = vmatprep.subr.mxu0 0.0
    %712 = vmatpush1.msra.mxu0 0.0
    %713 = vmatprep.subr.mxu0 0.0
    %714 = vmatpush1.msra.mxu0 0.0
    %715 = vmatprep.subr.mxu0 0.0
    %716 = vmatpush1.msra.mxu0 0.0
    %717 = vmatprep.subr.mxu0 0.0
    %718 = vmatpush1.msra.mxu0 0.0
    %719 = vmatprep.subr.mxu0 0.0
    %720 = vmatpush1.msra.mxu0 0.0
    %721 = vmatprep.subr.mxu0 0.0
    %722 = vmatpush1.msra.mxu0 0.0
    %723 = vmatprep.subr.mxu0 0.0
    %724 = vmatpush1.msra.mxu0 0.0
    %725 = vmatprep.subr.mxu0 0.0
    %726 = vmatpush1.msra.mxu0 0.0
    %727 = vmatprep.subr.mxu0 0.0
    %728 = vmatpush1.msra.mxu0 0.0
    %729 = vmatprep.subr.mxu0 0.0
    %730 = vmatpush1.msra.mxu0 0.0
    %731 = vmatprep.subr.mxu0 0.0
    %732 = vmatpush1.msra.mxu0 %v510
    %733 = vmatprep.subr.mxu0 0.0
    %734 = vmatpush2.msra.mxu0 0.0
    %735 = vmatprep.subr.mxu0 0.0
    %736 = vmatpush2.msra.mxu0 0.0
    %737 = vmatprep.subr.mxu0 0.0
    %738 = vmatpush2.msra.mxu0 0.0
    %739 = vmatprep.subr.mxu0 0.0
    %740 = vmatpush2.msra.mxu0 0.0
    %741 = vmatprep.subr.mxu0 0.0
    %742 = vmatpush2.msra.mxu0 0.0
    %743 = vmatprep.subr.mxu0 0.0
    %744 = vmatpush2.msra.mxu0 0.0
    %745 = vmatprep.subr.mxu0 0.0
    %746 = vmatpush2.msra.mxu0 0.0
    %747 = vmatprep.subr.mxu0 0.0
    %748 = vmatpush2.msra.mxu0 0.0
    %749 = vmatprep.subr.mxu0 0.0
    %750 = vmatpush2.msra.mxu0 0.0
    %751 = vmatprep.subr.mxu0 0.0
    %752 = vmatpush2.msra.mxu0 0.0
    %753 = vmatprep.subr.mxu0 0.0
    %754 = vmatpush2.msra.mxu0 0.0
    %755 = vmatprep.subr.mxu0 0.0
    %756 = vmatpush2.msra.mxu0 0.0
    %757 = vmatprep.subr.mxu0 0.0
    %758 = vmatpush2.msra.mxu0 0.0
    %759 = vmatprep.subr.mxu0 0.0
    %760 = vmatpush2.msra.mxu0 0.0
    %761 = vmatprep.subr.mxu0 0.0
    %762 = vmatpush2.msra.mxu0 0.0
    %763 = vmatprep.subr.mxu0 0.0
    %764 = vmatpush2.msra.mxu0 0.0
    %765 = vmatprep.mubr.f32.mxu0 0.0
    %766 = vmatmul.mubr.f32.gmra.mxu0 %v699
    %v767 = vpop.f32.mrf.mxu0
    %v768 = vadd.f32 0.0, %v767
    %v769 = vpop.f32.mrf.mxu0
    %770 = vdwg.mxu0
    %v772 = vsel %vm675, %v697, 0
    %774 = vmatprep.subr.mxu0 0.0
    %775 = vmatpush1.msra.mxu0 0.0
    %776 = vmatprep.subr.mxu0 0.0
    %777 = vmatpush1.msra.mxu0 0.0
    %778 = vmatprep.subr.mxu0 0.0
    %779 = vmatpush1.msra.mxu0 0.0
    %780 = vmatprep.subr.mxu0 0.0
    %781 = vmatpush1.msra.mxu0 0.0
    %782 = vmatprep.subr.mxu0 0.0
    %783 = vmatpush1.msra.mxu0 0.0
    %784 = vmatprep.subr.mxu0 0.0
    %785 = vmatpush1.msra.mxu0 0.0
    %786 = vmatprep.subr.mxu0 0.0
    %787 = vmatpush1.msra.mxu0 0.0
    %788 = vmatprep.subr.mxu0 0.0
    %789 = vmatpush1.msra.mxu0 0.0
    %790 = vmatprep.subr.mxu0 0.0
    %791 = vmatpush1.msra.mxu0 0.0
    %792 = vmatprep.subr.mxu0 0.0
    %793 = vmatpush1.msra.mxu0 0.0
    %794 = vmatprep.subr.mxu0 0.0
    %795 = vmatpush1.msra.mxu0 0.0
    %796 = vmatprep.subr.mxu0 0.0
    %797 = vmatpush1.msra.mxu0 0.0
    %798 = vmatprep.subr.mxu0 0.0
    %799 = vmatpush1.msra.mxu0 0.0
    %800 = vmatprep.subr.mxu0 0.0
    %801 = vmatpush1.msra.mxu0 0.0
    %802 = vmatprep.subr.mxu0 0.0
    %803 = vmatpush1.msra.mxu0 0.0
    %804 = vmatprep.subr.mxu0 0.0
    %805 = vmatpush1.msra.mxu0 %v515
    %806 = vmatprep.subr.mxu0 0.0
    %807 = vmatpush2.msra.mxu0 0.0
    %808 = vmatprep.subr.mxu0 0.0
    %809 = vmatpush2.msra.mxu0 0.0
    %810 = vmatprep.subr.mxu0 0.0
    %811 = vmatpush2.msra.mxu0 0.0
    %812 = vmatprep.subr.mxu0 0.0
    %813 = vmatpush2.msra.mxu0 0.0
    %814 = vmatprep.subr.mxu0 0.0
    %815 = vmatpush2.msra.mxu0 0.0
    %816 = vmatprep.subr.mxu0 0.0
    %817 = vmatpush2.msra.mxu0 0.0
    %818 = vmatprep.subr.mxu0 0.0
    %819 = vmatpush2.msra.mxu0 0.0
    %820 = vmatprep.subr.mxu0 0.0
    %821 = vmatpush2.msra.mxu0 0.0
    %822 = vmatprep.subr.mxu0 0.0
    %823 = vmatpush2.msra.mxu0 0.0
    %824 = vmatprep.subr.mxu0 0.0
    %825 = vmatpush2.msra.mxu0 0.0
    %826 = vmatprep.subr.mxu0 0.0
    %827 = vmatpush2.msra.mxu0 0.0
    %828 = vmatprep.subr.mxu0 0.0
    %829 = vmatpush2.msra.mxu0 0.0
    %830 = vmatprep.subr.mxu0 0.0
    %831 = vmatpush2.msra.mxu0 0.0
    %832 = vmatprep.subr.mxu0 0.0
    %833 = vmatpush2.msra.mxu0 0.0
    %834 = vmatprep.subr.mxu0 0.0
    %835 = vmatpush2.msra.mxu0 0.0
    %836 = vmatprep.subr.mxu0 0.0
    %837 = vmatpush2.msra.mxu0 0.0
    %838 = vmatprep.mubr.f32.mxu0 0.0
    %839 = vmatmul.mubr.f32.gmra.mxu0 %v772
    %v840 = vpop.f32.mrf.mxu0
    %v841 = vadd.f32 0.0, %v840
    %v842 = vpop.f32.mrf.mxu0
    %843 = vdwg.mxu0
    %844 = vrot.lane.b32.xlu0 %v344, 112
    %v845 = vpop.permute.xlu0 %844
    %846 = vrot.lane.b32.xlu0 %v424, 112
    %v847 = vpop.permute.xlu0 %846
    %v848 = vsel %vm518, %v845, 0
    %v850 = vsel %vm518, %v847, 0
    %852 = vmatprep.subr.mxu0 0.0
    %853 = vmatpush1.xpose.msra.mxu0 0.0
    %854 = vmatprep.subr.mxu0 0.0
    %855 = vmatpush1.xpose.msra.mxu0 0.0
    %856 = vmatprep.subr.mxu0 0.0
    %857 = vmatpush1.xpose.msra.mxu0 0.0
    %858 = vmatprep.subr.mxu0 0.0
    %859 = vmatpush1.xpose.msra.mxu0 0.0
    %860 = vmatprep.subr.mxu0 0.0
    %861 = vmatpush1.xpose.msra.mxu0 0.0
    %862 = vmatprep.subr.mxu0 0.0
    %863 = vmatpush1.xpose.msra.mxu0 0.0
    %864 = vmatprep.subr.mxu0 0.0
    %865 = vmatpush1.xpose.msra.mxu0 0.0
    %866 = vmatprep.subr.mxu0 0.0
    %867 = vmatpush1.xpose.msra.mxu0 0.0
    %868 = vmatprep.subr.mxu0 0.0
    %869 = vmatpush1.xpose.msra.mxu0 0.0
    %870 = vmatprep.subr.mxu0 0.0
    %871 = vmatpush1.xpose.msra.mxu0 0.0
    %872 = vmatprep.subr.mxu0 0.0
    %873 = vmatpush1.xpose.msra.mxu0 0.0
    %874 = vmatprep.subr.mxu0 0.0
    %875 = vmatpush1.xpose.msra.mxu0 0.0
    %876 = vmatprep.subr.mxu0 0.0
    %877 = vmatpush1.xpose.msra.mxu0 0.0
    %878 = vmatprep.subr.mxu0 0.0
    %879 = vmatpush1.xpose.msra.mxu0 0.0
    %880 = vmatprep.subr.mxu0 0.0
    %881 = vmatpush1.xpose.msra.mxu0 0.0
    %882 = vmatprep.subr.mxu0 0.0
    %883 = vmatpush1.xpose.msra.mxu0 %v850
    %884 = vmatprep.subr.mxu0 0.0
    %885 = vmatpush2.xpose.msra.mxu0 0.0
    %886 = vmatprep.subr.mxu0 0.0
    %887 = vmatpush2.xpose.msra.mxu0 0.0
    %888 = vmatprep.subr.mxu0 0.0
    %889 = vmatpush2.xpose.msra.mxu0 0.0
    %890 = vmatprep.subr.mxu0 0.0
    %891 = vmatpush2.xpose.msra.mxu0 0.0
    %892 = vmatprep.subr.mxu0 0.0
    %893 = vmatpush2.xpose.msra.mxu0 0.0
    %894 = vmatprep.subr.mxu0 0.0
    %895 = vmatpush2.xpose.msra.mxu0 0.0
    %896 = vmatprep.subr.mxu0 0.0
    %897 = vmatpush2.xpose.msra.mxu0 0.0
    %898 = vmatprep.subr.mxu0 0.0
    %899 = vmatpush2.xpose.msra.mxu0 0.0
    %900 = vmatprep.subr.mxu0 0.0
    %901 = vmatpush2.xpose.msra.mxu0 0.0
    %902 = vmatprep.subr.mxu0 0.0
    %903 = vmatpush2.xpose.msra.mxu0 0.0
    %904 = vmatprep.subr.mxu0 0.0
    %905 = vmatpush2.xpose.msra.mxu0 0.0
    %906 = vmatprep.subr.mxu0 0.0
    %907 = vmatpush2.xpose.msra.mxu0 0.0
    %908 = vmatprep.subr.mxu0 0.0
    %909 = vmatpush2.xpose.msra.mxu0 0.0
    %910 = vmatprep.subr.mxu0 0.0
    %911 = vmatpush2.xpose.msra.mxu0 0.0
    %912 = vmatprep.subr.mxu0 0.0
    %913 = vmatpush2.xpose.msra.mxu0 0.0
    %914 = vmatprep.subr.mxu0 0.0
    %915 = vmatpush2.xpose.msra.mxu0 0.0
    %916 = vmatprep.mubr.f32.mxu0 0.0
    %917 = vmatmul.mubr.f32.gmra.mxu0 %v848
    %v918 = vpop.f32.mrf.mxu0
    %v919 = vadd.f32 0.0, %v918
    %v920 = vpop.f32.mrf.mxu0
    %921 = vdwg.mxu0
    %922 = vrot.lane.b32.xlu0 %v345, 112
    %v923 = vpop.permute.xlu0 %922
    %924 = vrot.lane.b32.xlu0 %v429, 112
    %v925 = vpop.permute.xlu0 %924
    %v926 = vsel %vm518, %v923, 0
    %v928 = vsel %vm518, %v925, 0
    %930 = vmatprep.subr.mxu0 0.0
    %931 = vmatpush1.xpose.msra.mxu0 0.0
    %932 = vmatprep.subr.mxu0 0.0
    %933 = vmatpush1.xpose.msra.mxu0 0.0
    %934 = vmatprep.subr.mxu0 0.0
    %935 = vmatpush1.xpose.msra.mxu0 0.0
    %936 = vmatprep.subr.mxu0 0.0
    %937 = vmatpush1.xpose.msra.mxu0 0.0
    %938 = vmatprep.subr.mxu0 0.0
    %939 = vmatpush1.xpose.msra.mxu0 0.0
    %940 = vmatprep.subr.mxu0 0.0
    %941 = vmatpush1.xpose.msra.mxu0 0.0
    %942 = vmatprep.subr.mxu0 0.0
    %943 = vmatpush1.xpose.msra.mxu0 0.0
    %944 = vmatprep.subr.mxu0 0.0
    %945 = vmatpush1.xpose.msra.mxu0 0.0
    %946 = vmatprep.subr.mxu0 0.0
    %947 = vmatpush1.xpose.msra.mxu0 0.0
    %948 = vmatprep.subr.mxu0 0.0
    %949 = vmatpush1.xpose.msra.mxu0 0.0
    %950 = vmatprep.subr.mxu0 0.0
    %951 = vmatpush1.xpose.msra.mxu0 0.0
    %952 = vmatprep.subr.mxu0 0.0
    %953 = vmatpush1.xpose.msra.mxu0 0.0
    %954 = vmatprep.subr.mxu0 0.0
    %955 = vmatpush1.xpose.msra.mxu0 0.0
    %956 = vmatprep.subr.mxu0 0.0
    %957 = vmatpush1.xpose.msra.mxu0 0.0
    %958 = vmatprep.subr.mxu0 0.0
    %959 = vmatpush1.xpose.msra.mxu0 0.0
    %960 = vmatprep.subr.mxu0 0.0
    %961 = vmatpush1.xpose.msra.mxu0 %v928
    %962 = vmatprep.subr.mxu0 0.0
    %963 = vmatpush2.xpose.msra.mxu0 0.0
    %964 = vmatprep.subr.mxu0 0.0
    %965 = vmatpush2.xpose.msra.mxu0 0.0
    %966 = vmatprep.subr.mxu0 0.0
    %967 = vmatpush2.xpose.msra.mxu0 0.0
    %968 = vmatprep.subr.mxu0 0.0
    %969 = vmatpush2.xpose.msra.mxu0 0.0
    %970 = vmatprep.subr.mxu0 0.0
    %971 = vmatpush2.xpose.msra.mxu0 0.0
    %972 = vmatprep.subr.mxu0 0.0
    %973 = vmatpush2.xpose.msra.mxu0 0.0
    %974 = vmatprep.subr.mxu0 0.0
    %975 = vmatpush2.xpose.msra.mxu0 0.0
    %976 = vmatprep.subr.mxu0 0.0
    %977 = vmatpush2.xpose.msra.mxu0 0.0
    %978 = vmatprep.subr.mxu0 0.0
    %979 = vmatpush2.xpose.msra.mxu0 0.0
    %980 = vmatprep.subr.mxu0 0.0
    %981 = vmatpush2.xpose.msra.mxu0 0.0
    %982 = vmatprep.subr.mxu0 0.0
    %983 = vmatpush2.xpose.msra.mxu0 0.0
    %984 = vmatprep.subr.mxu0 0.0
    %985 = vmatpush2.xpose.msra.mxu0 0.0
    %986 = vmatprep.subr.mxu0 0.0
    %987 = vmatpush2.xpose.msra.mxu0 0.0
    %988 = vmatprep.subr.mxu0 0.0
    %989 = vmatpush2.xpose.msra.mxu0 0.0
    %990 = vmatprep.subr.mxu0 0.0
    %991 = vmatpush2.xpose.msra.mxu0 0.0
    %992 = vmatprep.subr.mxu0 0.0
    %993 = vmatpush2.xpose.msra.mxu0 0.0
    %994 = vmatprep.mubr.f32.mxu0 0.0
    %995 = vmatmul.mubr.f32.gmra.mxu0 %v926
    %v996 = vpop.f32.mrf.mxu0
    %v997 = vadd.f32 0.0, %v996
    %v998 = vpop.f32.mrf.mxu0
    %999 = vdwg.mxu0
    %v1000 = vsel %vm672, -1e+09, %v919
    %v1001 = vsel %vm672, -1e+09, %v997
    %v1002 = vsel %vm675, %v1000, -inf
    %1003 = vmax.xlane.f32.xlu0 %v1002
    %v1004 = vpop.xlane.xlu0 %1003
    %v1005 = vsel %vm675, %v1001, -inf
    %1006 = vmax.xlane.f32.xlu0 %v1005
    %v1007 = vpop.xlane.xlu0 %1006
    %v1008 = vsub.f32 %v1000, %v1004
    %v1009 = vsub.f32 %v1001, %v1007
    %v1010 = vmul.f32 %v1008, 1.442695
    %v1011 = vpow.pop %v1010
    %v1012 = vmul.f32 %v1009, 1.442695
    %v1013 = vpow.pop %v1012
    %v1014 = vsel %vm675, %v1011, 0.0
    %1015 = vadd.xlane.f32.xlu0 %v1014
    %v1016 = vpop.xlane.xlu0 %1015
    %v1017 = vsel %vm675, %v1013, 0.0
    %1018 = vadd.xlane.f32.xlu0 %v1017
    %v1019 = vpop.xlane.xlu0 %1018
    %v1020 = vrcp.pop %v1016
    %v1021 = vrcp.pop %v1019
    %v1022 = vmul.f32 %v1011, %v1020
    %v1023 = vmul.f32 %v1013, %v1021
    %1025 = vrot.lane.b32.xlu0 %v510, 112
    %v1026 = vpop.permute.xlu0 %1025
    %v1029 = vsel %vm675, %v1022, 0
    %1031 = vmatprep.subr.mxu0 0.0
    %1032 = vmatpush1.msra.mxu0 0.0
    %1033 = vmatprep.subr.mxu0 0.0
    %1034 = vmatpush1.msra.mxu0 0.0
    %1035 = vmatprep.subr.mxu0 0.0
    %1036 = vmatpush1.msra.mxu0 0.0
    %1037 = vmatprep.subr.mxu0 0.0
    %1038 = vmatpush1.msra.mxu0 0.0
    %1039 = vmatprep.subr.mxu0 0.0
    %1040 = vmatpush1.msra.mxu0 0.0
    %1041 = vmatprep.subr.mxu0 0.0
    %1042 = vmatpush1.msra.mxu0 0.0
    %1043 = vmatprep.subr.mxu0 0.0
    %1044 = vmatpush1.msra.mxu0 0.0
    %1045 = vmatprep.subr.mxu0 0.0
    %1046 = vmatpush1.msra.mxu0 0.0
    %1047 = vmatprep.subr.mxu0 0.0
    %1048 = vmatpush1.msra.mxu0 0.0
    %1049 = vmatprep.subr.mxu0 0.0
    %1050 = vmatpush1.msra.mxu0 0.0
    %1051 = vmatprep.subr.mxu0 0.0
    %1052 = vmatpush1.msra.mxu0 0.0
    %1053 = vmatprep.subr.mxu0 0.0
    %1054 = vmatpush1.msra.mxu0 0.0
    %1055 = vmatprep.subr.mxu0 0.0
    %1056 = vmatpush1.msra.mxu0 0.0
    %1057 = vmatprep.subr.mxu0 0.0
    %1058 = vmatpush1.msra.mxu0 0.0
    %1059 = vmatprep.subr.mxu0 0.0
    %1060 = vmatpush1.msra.mxu0 0.0
    %1061 = vmatprep.subr.mxu0 0.0
    %1062 = vmatpush1.msra.mxu0 %v1026
    %1063 = vmatprep.subr.mxu0 0.0
    %1064 = vmatpush2.msra.mxu0 0.0
    %1065 = vmatprep.subr.mxu0 0.0
    %1066 = vmatpush2.msra.mxu0 0.0
    %1067 = vmatprep.subr.mxu0 0.0
    %1068 = vmatpush2.msra.mxu0 0.0
    %1069 = vmatprep.subr.mxu0 0.0
    %1070 = vmatpush2.msra.mxu0 0.0
    %1071 = vmatprep.subr.mxu0 0.0
    %1072 = vmatpush2.msra.mxu0 0.0
    %1073 = vmatprep.subr.mxu0 0.0
    %1074 = vmatpush2.msra.mxu0 0.0
    %1075 = vmatprep.subr.mxu0 0.0
    %1076 = vmatpush2.msra.mxu0 0.0
    %1077 = vmatprep.subr.mxu0 0.0
    %1078 = vmatpush2.msra.mxu0 0.0
    %1079 = vmatprep.subr.mxu0 0.0
    %1080 = vmatpush2.msra.mxu0 0.0
    %1081 = vmatprep.subr.mxu0 0.0
    %1082 = vmatpush2.msra.mxu0 0.0
    %1083 = vmatprep.subr.mxu0 0.0
    %1084 = vmatpush2.msra.mxu0 0.0
    %1085 = vmatprep.subr.mxu0 0.0
    %1086 = vmatpush2.msra.mxu0 0.0
    %1087 = vmatprep.subr.mxu0 0.0
    %1088 = vmatpush2.msra.mxu0 0.0
    %1089 = vmatprep.subr.mxu0 0.0
    %1090 = vmatpush2.msra.mxu0 0.0
    %1091 = vmatprep.subr.mxu0 0.0
    %1092 = vmatpush2.msra.mxu0 0.0
    %1093 = vmatprep.subr.mxu0 0.0
    %1094 = vmatpush2.msra.mxu0 0.0
    %1095 = vmatprep.mubr.f32.mxu0 0.0
    %1096 = vmatmul.mubr.f32.gmra.mxu0 %v1029
    %v1097 = vpop.f32.mrf.mxu0
    %v1098 = vadd.f32 0.0, %v1097
    %v1099 = vpop.f32.mrf.mxu0
    %1100 = vdwg.mxu0
    %1102 = vrot.lane.b32.xlu0 %v515, 112
    %v1103 = vpop.permute.xlu0 %1102
    %v1106 = vsel %vm675, %v1023, 0
    %1108 = vmatprep.subr.mxu0 0.0
    %1109 = vmatpush1.msra.mxu0 0.0
    %1110 = vmatprep.subr.mxu0 0.0
    %1111 = vmatpush1.msra.mxu0 0.0
    %1112 = vmatprep.subr.mxu0 0.0
    %1113 = vmatpush1.msra.mxu0 0.0
    %1114 = vmatprep.subr.mxu0 0.0
    %1115 = vmatpush1.msra.mxu0 0.0
    %1116 = vmatprep.subr.mxu0 0.0
    %1117 = vmatpush1.msra.mxu0 0.0
    %1118 = vmatprep.subr.mxu0 0.0
    %1119 = vmatpush1.msra.mxu0 0.0
    %1120 = vmatprep.subr.mxu0 0.0
    %1121 = vmatpush1.msra.mxu0 0.0
    %1122 = vmatprep.subr.mxu0 0.0
    %1123 = vmatpush1.msra.mxu0 0.0
    %1124 = vmatprep.subr.mxu0 0.0
    %1125 = vmatpush1.msra.mxu0 0.0
    %1126 = vmatprep.subr.mxu0 0.0
    %1127 = vmatpush1.msra.mxu0 0.0
    %1128 = vmatprep.subr.mxu0 0.0
    %1129 = vmatpush1.msra.mxu0 0.0
    %1130 = vmatprep.subr.mxu0 0.0
    %1131 = vmatpush1.msra.mxu0 0.0
    %1132 = vmatprep.subr.mxu0 0.0
    %1133 = vmatpush1.msra.mxu0 0.0
    %1134 = vmatprep.subr.mxu0 0.0
    %1135 = vmatpush1.msra.mxu0 0.0
    %1136 = vmatprep.subr.mxu0 0.0
    %1137 = vmatpush1.msra.mxu0 0.0
    %1138 = vmatprep.subr.mxu0 0.0
    %1139 = vmatpush1.msra.mxu0 %v1103
    %1140 = vmatprep.subr.mxu0 0.0
    %1141 = vmatpush2.msra.mxu0 0.0
    %1142 = vmatprep.subr.mxu0 0.0
    %1143 = vmatpush2.msra.mxu0 0.0
    %1144 = vmatprep.subr.mxu0 0.0
    %1145 = vmatpush2.msra.mxu0 0.0
    %1146 = vmatprep.subr.mxu0 0.0
    %1147 = vmatpush2.msra.mxu0 0.0
    %1148 = vmatprep.subr.mxu0 0.0
    %1149 = vmatpush2.msra.mxu0 0.0
    %1150 = vmatprep.subr.mxu0 0.0
    %1151 = vmatpush2.msra.mxu0 0.0
    %1152 = vmatprep.subr.mxu0 0.0
    %1153 = vmatpush2.msra.mxu0 0.0
    %1154 = vmatprep.subr.mxu0 0.0
    %1155 = vmatpush2.msra.mxu0 0.0
    %1156 = vmatprep.subr.mxu0 0.0
    %1157 = vmatpush2.msra.mxu0 0.0
    %1158 = vmatprep.subr.mxu0 0.0
    %1159 = vmatpush2.msra.mxu0 0.0
    %1160 = vmatprep.subr.mxu0 0.0
    %1161 = vmatpush2.msra.mxu0 0.0
    %1162 = vmatprep.subr.mxu0 0.0
    %1163 = vmatpush2.msra.mxu0 0.0
    %1164 = vmatprep.subr.mxu0 0.0
    %1165 = vmatpush2.msra.mxu0 0.0
    %1166 = vmatprep.subr.mxu0 0.0
    %1167 = vmatpush2.msra.mxu0 0.0
    %1168 = vmatprep.subr.mxu0 0.0
    %1169 = vmatpush2.msra.mxu0 0.0
    %1170 = vmatprep.subr.mxu0 0.0
    %1171 = vmatpush2.msra.mxu0 0.0
    %1172 = vmatprep.mubr.f32.mxu0 0.0
    %1173 = vmatmul.mubr.f32.gmra.mxu0 %v1106
    %v1174 = vpop.f32.mrf.mxu0
    %v1175 = vadd.f32 0.0, %v1174
    %v1176 = vpop.f32.mrf.mxu0
    %1177 = vdwg.mxu0
    %1178 = vst.msk [vmem:[#allocation24] sm:$0xff] %vm675, %v696
    %1179 = vst.msk [vmem:[#allocation24 + $0x8] sm:$0xff] %vm675, %v697
    %1180 = vst.msk [vmem:[#allocation24 + $0x10] sm:$0xff] %vm675, %v1022
    %1181 = vst.msk [vmem:[#allocation24 + $0x18] sm:$0xff] %vm675, %v1023
    %1184 = vrot.lane.b32.xlu0 %v1098, 16
    %v1185 = vpop.permute.xlu0 %1184
    %1186 = vrot.lane.b32.xlu0 %v1175, 16
    %v1187 = vpop.permute.xlu0 %1186
    %v1190 = vsel %vm518, %v768, %v1185
    %v1191 = vsel %vm518, %v841, %v1187
    %v1192 = vld [vmem:[#allocation7] sm:$0xff]
    %v1193 = vld [vmem:[#allocation7 + $0x8] sm:$0xff]
    %v1194 = vld [vmem:[#allocation7 + $0x10] sm:$0xff]
    %v1195 = vld [vmem:[#allocation7 + $0x18] sm:$0xff]
    %v1196 = vld [vmem:[%s9] sm:$0x1]
    %v1198 = vlaneseq
    %v1199 = vshrl.u32 %v1198, 7
    %v1200 = vsub.s32 0, %v1199
    %v1201 = vrot.slane %v1196, %v1200
    %v1204 = vsel %vm262, %v1190, 0
    %v1207 = vsel %vm262, %v1191, 0
    %1209 = vmatprep.subr.mxu0 0.0
    %1210 = vmatpush1.msra.mxu0 0.0
    %1211 = vmatprep.subr.mxu0 0.0
    %1212 = vmatpush1.msra.mxu0 0.0
    %1213 = vmatprep.subr.mxu0 0.0
    %1214 = vmatpush1.msra.mxu0 0.0
    %1215 = vmatprep.subr.mxu0 0.0
    %1216 = vmatpush1.msra.mxu0 0.0
    %1217 = vmatprep.subr.mxu0 0.0
    %1218 = vmatpush1.msra.mxu0 0.0
    %1219 = vmatprep.subr.mxu0 0.0
    %1220 = vmatpush1.msra.mxu0 0.0
    %1221 = vmatprep.subr.mxu0 0.0
    %1222 = vmatpush1.msra.mxu0 0.0
    %1223 = vmatprep.subr.mxu0 0.0
    %1224 = vmatpush1.msra.mxu0 0.0
    %1225 = vmatprep.subr.mxu0 0.0
    %1226 = vmatpush1.msra.mxu0 0.0
    %1227 = vmatprep.subr.mxu0 0.0
    %1228 = vmatpush1.msra.mxu0 0.0
    %1229 = vmatprep.subr.mxu0 0.0
    %1230 = vmatpush1.msra.mxu0 0.0
    %1231 = vmatprep.subr.mxu0 0.0
    %1232 = vmatpush1.msra.mxu0 0.0
    %1233 = vmatprep.subr.mxu0 0.0
    %1234 = vmatpush1.msra.mxu0 %v1195
    %1235 = vmatprep.subr.mxu0 0.0
    %1236 = vmatpush1.msra.mxu0 %v1194
    %1237 = vmatprep.subr.mxu0 0.0
    %1238 = vmatpush1.msra.mxu0 %v1193
    %1239 = vmatprep.subr.mxu0 0.0
    %1240 = vmatpush1.msra.mxu0 %v1192
    %1241 = vmatprep.subr.mxu0 0.0
    %1242 = vmatpush2.msra.mxu0 0.0
    %1243 = vmatprep.subr.mxu0 0.0
    %1244 = vmatpush2.msra.mxu0 0.0
    %1245 = vmatprep.subr.mxu0 0.0
    %1246 = vmatpush2.msra.mxu0 0.0
    %1247 = vmatprep.subr.mxu0 0.0
    %1248 = vmatpush2.msra.mxu0 0.0
    %1249 = vmatprep.subr.mxu0 0.0
    %1250 = vmatpush2.msra.mxu0 0.0
    %1251 = vmatprep.subr.mxu0 0.0
    %1252 = vmatpush2.msra.mxu0 0.0
    %1253 = vmatprep.subr.mxu0 0.0
    %1254 = vmatpush2.msra.mxu0 0.0
    %1255 = vmatprep.subr.mxu0 0.0
    %1256 = vmatpush2.msra.mxu0 0.0
    %1257 = vmatprep.subr.mxu0 0.0
    %1258 = vmatpush2.msra.mxu0 0.0
    %1259 = vmatprep.subr.mxu0 0.0
    %1260 = vmatpush2.msra.mxu0 0.0
    %1261 = vmatprep.subr.mxu0 0.0
    %1262 = vmatpush2.msra.mxu0 0.0
    %1263 = vmatprep.subr.mxu0 0.0
    %1264 = vmatpush2.msra.mxu0 0.0
    %1265 = vmatprep.subr.mxu0 0.0
    %1266 = vmatpush2.msra.mxu0 0.0
    %1267 = vmatprep.subr.mxu0 0.0
    %1268 = vmatpush2.msra.mxu0 0.0
    %1269 = vmatprep.subr.mxu0 0.0
    %1270 = vmatpush2.msra.mxu0 0.0
    %1271 = vmatprep.subr.mxu0 0.0
    %1272 = vmatpush2.msra.mxu0 0.0
    %1273 = vmatprep.mubr.f32.mxu0 0.0
    %1274 = vmatmul.mubr.f32.gmra.mxu0 %v1204
    %v1275 = vpop.f32.mrf.mxu0
    %v1276 = vadd.f32 %v1201, %v1275
    %v1277 = vpop.f32.mrf.mxu0
    %1278 = vmatprep.mubr.f32.mxu0 0.0
    %1279 = vmatmul.mubr.f32.gmra.mxu0 %v1207
    %v1280 = vpop.f32.mrf.mxu0
    %v1281 = vadd.f32 %v1201, %v1280
    %v1282 = vpop.f32.mrf.mxu0
    %1283 = vdwg.mxu0
    %v1284 = vadd.f32 %v1276, %v242
    %v1285 = vadd.f32 %v1281, %v243
    %v1286 = vld [vmem:[#allocation8] sm:$0xff]
    %v1287 = vld [vmem:[#allocation8 + $0x8] sm:$0xff]
    %v1288 = vld [vmem:[#allocation8 + $0x10] sm:$0xff]
    %v1289 = vld [vmem:[#allocation8 + $0x18] sm:$0xff]
    %v1290 = vld [vmem:[#allocation10] sm:$0x1]
    %v1292 = vlaneseq
    %v1293 = vshrl.u32 %v1292, 7
    %v1294 = vsub.s32 0, %v1293
    %v1295 = vrot.slane %v1290, %v1294
    %v1298 = vsel %vm262, %v1284, 0
    %v1301 = vsel %vm262, %v1285, 0
    %1303 = vmatprep.subr.mxu0 0.0
    %1304 = vmatpush1.msra.mxu0 0.0
    %1305 = vmatprep.subr.mxu0 0.0
    %1306 = vmatpush1.msra.mxu0 0.0
    %1307 = vmatprep.subr.mxu0 0.0
    %1308 = vmatpush1.msra.mxu0 0.0
    %1309 = vmatprep.subr.mxu0 0.0
    %1310 = vmatpush1.msra.mxu0 0.0
    %1311 = vmatprep.subr.mxu0 0.0
    %1312 = vmatpush1.msra.mxu0 0.0
    %1313 = vmatprep.subr.mxu0 0.0
    %1314 = vmatpush1.msra.mxu0 0.0
    %1315 = vmatprep.subr.mxu0 0.0
    %1316 = vmatpush1.msra.mxu0 0.0
    %1317 = vmatprep.subr.mxu0 0.0
    %1318 = vmatpush1.msra.mxu0 0.0
    %1319 = vmatprep.subr.mxu0 0.0
    %1320 = vmatpush1.msra.mxu0 0.0
    %1321 = vmatprep.subr.mxu0 0.0
    %1322 = vmatpush1.msra.mxu0 0.0
    %1323 = vmatprep.subr.mxu0 0.0
    %1324 = vmatpush1.msra.mxu0 0.0
    %1325 = vmatprep.subr.mxu0 0.0
    %1326 = vmatpush1.msra.mxu0 0.0
    %1327 = vmatprep.subr.mxu0 0.0
    %1328 = vmatpush1.msra.mxu0 %v1289
    %1329 = vmatprep.subr.mxu0 0.0
    %1330 = vmatpush1.msra.mxu0 %v1288
    %1331 = vmatprep.subr.mxu0 0.0
    %1332 = vmatpush1.msra.mxu0 %v1287
    %1333 = vmatprep.subr.mxu0 0.0
    %1334 = vmatpush1.msra.mxu0 %v1286
    %1335 = vmatprep.subr.mxu0 0.0
    %1336 = vmatpush2.msra.mxu0 0.0
    %1337 = vmatprep.subr.mxu0 0.0
    %1338 = vmatpush2.msra.mxu0 0.0
    %1339 = vmatprep.subr.mxu0 0.0
    %1340 = vmatpush2.msra.mxu0 0.0
    %1341 = vmatprep.subr.mxu0 0.0
    %1342 = vmatpush2.msra.mxu0 0.0
    %1343 = vmatprep.subr.mxu0 0.0
    %1344 = vmatpush2.msra.mxu0 0.0
    %1345 = vmatprep.subr.mxu0 0.0
    %1346 = vmatpush2.msra.mxu0 0.0
    %1347 = vmatprep.subr.mxu0 0.0
    %1348 = vmatpush2.msra.mxu0 0.0
    %1349 = vmatprep.subr.mxu0 0.0
    %1350 = vmatpush2.msra.mxu0 0.0
    %1351 = vmatprep.subr.mxu0 0.0
    %1352 = vmatpush2.msra.mxu0 0.0
    %1353 = vmatprep.subr.mxu0 0.0
    %1354 = vmatpush2.msra.mxu0 0.0
    %1355 = vmatprep.subr.mxu0 0.0
    %1356 = vmatpush2.msra.mxu0 0.0
    %1357 = vmatprep.subr.mxu0 0.0
    %1358 = vmatpush2.msra.mxu0 0.0
    %1359 = vmatprep.subr.mxu0 0.0
    %1360 = vmatpush2.msra.mxu0 0.0
    %1361 = vmatprep.subr.mxu0 0.0
    %1362 = vmatpush2.msra.mxu0 0.0
    %1363 = vmatprep.subr.mxu0 0.0
    %1364 = vmatpush2.msra.mxu0 0.0
    %1365 = vmatprep.subr.mxu0 0.0
    %1366 = vmatpush2.msra.mxu0 0.0
    %1367 = vmatprep.mubr.f32.mxu0 0.0
    %1368 = vmatmul.mubr.f32.gmra.mxu0 %v1298
    %v1369 = vpop.f32.mrf.mxu0
    %v1370 = vadd.f32 %v1295, %v1369
    %v1371 = vpop.f32.mrf.mxu0
    %1372 = vmatprep.mubr.f32.mxu0 0.0
    %1373 = vmatmul.mubr.f32.gmra.mxu0 %v1301
    %v1374 = vpop.f32.mrf.mxu0
    %v1375 = vadd.f32 %v1295, %v1374
    %v1376 = vpop.f32.mrf.mxu0
    %1377 = vdwg.mxu0
    %v1378 = vmul.f32 %v1370, 0.25
    %v1379 = vmul.f32 %v1375, 0.25
    %v1380 = vld [vmem:[#allocation11] sm:$0xff]
    %v1381 = vld [vmem:[#allocation11 + $0x8] sm:$0xff]
    %v1382 = vld [vmem:[#allocation11 + $0x10] sm:$0xff]
    %v1383 = vld [vmem:[#allocation11 + $0x18] sm:$0xff]
    %v1384 = vld [vmem:[#allocation13] sm:$0x1]
    %v1386 = vlaneseq
    %v1387 = vshrl.u32 %v1386, 7
    %v1388 = vsub.s32 0, %v1387
    %v1389 = vrot.slane %v1384, %v1388
    %v1392 = vsel %vm262, %v244, 0
    %v1395 = vsel %vm262, %v245, 0
    %1397 = vmatprep.subr.mxu0 0.0
    %1398 = vmatpush1.msra.mxu0 0.0
    %1399 = vmatprep.subr.mxu0 0.0
    %1400 = vmatpush1.msra.mxu0 0.0
    %1401 = vmatprep.subr.mxu0 0.0
    %1402 = vmatpush1.msra.mxu0 0.0
    %1403 = vmatprep.subr.mxu0 0.0
    %1404 = vmatpush1.msra.mxu0 0.0
    %1405 = vmatprep.subr.mxu0 0.0
    %1406 = vmatpush1.msra.mxu0 0.0
    %1407 = vmatprep.subr.mxu0 0.0
    %1408 = vmatpush1.msra.mxu0 0.0
    %1409 = vmatprep.subr.mxu0 0.0
    %1410 = vmatpush1.msra.mxu0 0.0
    %1411 = vmatprep.subr.mxu0 0.0
    %1412 = vmatpush1.msra.mxu0 0.0
    %1413 = vmatprep.subr.mxu0 0.0
    %1414 = vmatpush1.msra.mxu0 0.0
    %1415 = vmatprep.subr.mxu0 0.0
    %1416 = vmatpush1.msra.mxu0 0.0
    %1417 = vmatprep.subr.mxu0 0.0
    %1418 = vmatpush1.msra.mxu0 0.0
    %1419 = vmatprep.subr.mxu0 0.0
    %1420 = vmatpush1.msra.mxu0 0.0
    %1421 = vmatprep.subr.mxu0 0.0
    %1422 = vmatpush1.msra.mxu0 %v1383
    %1423 = vmatprep.subr.mxu0 0.0
    %1424 = vmatpush1.msra.mxu0 %v1382
    %1425 = vmatprep.subr.mxu0 0.0
    %1426 = vmatpush1.msra.mxu0 %v1381
    %1427 = vmatprep.subr.mxu0 0.0
    %1428 = vmatpush1.msra.mxu0 %v1380
    %1429 = vmatprep.subr.mxu0 0.0
    %1430 = vmatpush2.msra.mxu0 0.0
    %1431 = vmatprep.subr.mxu0 0.0
    %1432 = vmatpush2.msra.mxu0 0.0
    %1433 = vmatprep.subr.mxu0 0.0
    %1434 = vmatpush2.msra.mxu0 0.0
    %1435 = vmatprep.subr.mxu0 0.0
    %1436 = vmatpush2.msra.mxu0 0.0
    %1437 = vmatprep.subr.mxu0 0.0
    %1438 = vmatpush2.msra.mxu0 0.0
    %1439 = vmatprep.subr.mxu0 0.0
    %1440 = vmatpush2.msra.mxu0 0.0
    %1441 = vmatprep.subr.mxu0 0.0
    %1442 = vmatpush2.msra.mxu0 0.0
    %1443 = vmatprep.subr.mxu0 0.0
    %1444 = vmatpush2.msra.mxu0 0.0
    %1445 = vmatprep.subr.mxu0 0.0
    %1446 = vmatpush2.msra.mxu0 0.0
    %1447 = vmatprep.subr.mxu0 0.0
    %1448 = vmatpush2.msra.mxu0 0.0
    %1449 = vmatprep.subr.mxu0 0.0
    %1450 = vmatpush2.msra.mxu0 0.0
    %1451 = vmatprep.subr.mxu0 0.0
    %1452 = vmatpush2.msra.mxu0 0.0
    %1453 = vmatprep.subr.mxu0 0.0
    %1454 = vmatpush2.msra.mxu0 0.0
    %1455 = vmatprep.subr.mxu0 0.0
    %1456 = vmatpush2.msra.mxu0 0.0
    %1457 = vmatprep.subr.mxu0 0.0
    %1458 = vmatpush2.msra.mxu0 0.0
    %1459 = vmatprep.subr.mxu0 0.0
    %1460 = vmatpush2.msra.mxu0 0.0
    %1461 = vmatprep.mubr.f32.mxu0 0.0
    %1462 = vmatmul.mubr.f32.gmra.mxu0 %v1392
    %v1463 = vpop.f32.mrf.mxu0
    %v1464 = vadd.f32 %v1389, %v1463
    %v1465 = vpop.f32.mrf.mxu0
    %1466 = vmatprep.mubr.f32.mxu0 0.0
    %1467 = vmatmul.mubr.f32.gmra.mxu0 %v1395
    %v1468 = vpop.f32.mrf.mxu0
    %v1469 = vadd.f32 %v1389, %v1468
    %v1470 = vpop.f32.mrf.mxu0
    %1471 = vdwg.mxu0
    %v1472 = vld [vmem:[#allocation14] sm:$0xff]
    %v1473 = vld [vmem:[#allocation14 + $0x8] sm:$0xff]
    %v1474 = vld [vmem:[#allocation14 + $0x10] sm:$0xff]
    %v1475 = vld [vmem:[#allocation14 + $0x18] sm:$0xff]
    %v1476 = vld [vmem:[#allocation16] sm:$0x1]
    %v1478 = vlaneseq
    %v1479 = vshrl.u32 %v1478, 7
    %v1480 = vsub.s32 0, %v1479
    %v1481 = vrot.slane %v1476, %v1480
    %1483 = vmatprep.subr.mxu0 0.0
    %1484 = vmatpush1.msra.mxu0 0.0
    %1485 = vmatprep.subr.mxu0 0.0
    %1486 = vmatpush1.msra.mxu0 0.0
    %1487 = vmatprep.subr.mxu0 0.0
    %1488 = vmatpush1.msra.mxu0 0.0
    %1489 = vmatprep.subr.mxu0 0.0
    %1490 = vmatpush1.msra.mxu0 0.0
    %1491 = vmatprep.subr.mxu0 0.0
    %1492 = vmatpush1.msra.mxu0 0.0
    %1493 = vmatprep.subr.mxu0 0.0
    %1494 = vmatpush1.msra.mxu0 0.0
    %1495 = vmatprep.subr.mxu0 0.0
    %1496 = vmatpush1.msra.mxu0 0.0
    %1497 = vmatprep.subr.mxu0 0.0
    %1498 = vmatpush1.msra.mxu0 0.0
    %1499 = vmatprep.subr.mxu0 0.0
    %1500 = vmatpush1.msra.mxu0 0.0
    %1501 = vmatprep.subr.mxu0 0.0
    %1502 = vmatpush1.msra.mxu0 0.0
    %1503 = vmatprep.subr.mxu0 0.0
    %1504 = vmatpush1.msra.mxu0 0.0
    %1505 = vmatprep.subr.mxu0 0.0
    %1506 = vmatpush1.msra.mxu0 0.0
    %1507 = vmatprep.subr.mxu0 0.0
    %1508 = vmatpush1.msra.mxu0 %v1475
    %1509 = vmatprep.subr.mxu0 0.0
    %1510 = vmatpush1.msra.mxu0 %v1474
    %1511 = vmatprep.subr.mxu0 0.0
    %1512 = vmatpush1.msra.mxu0 %v1473
    %1513 = vmatprep.subr.mxu0 0.0
    %1514 = vmatpush1.msra.mxu0 %v1472
    %1515 = vmatprep.subr.mxu0 0.0
    %1516 = vmatpush2.msra.mxu0 0.0
    %1517 = vmatprep.subr.mxu0 0.0
    %1518 = vmatpush2.msra.mxu0 0.0
    %1519 = vmatprep.subr.mxu0 0.0
    %1520 = vmatpush2.msra.mxu0 0.0
    %1521 = vmatprep.subr.mxu0 0.0
    %1522 = vmatpush2.msra.mxu0 0.0
    %1523 = vmatprep.subr.mxu0 0.0
    %1524 = vmatpush2.msra.mxu0 0.0
    %1525 = vmatprep.subr.mxu0 0.0
    %1526 = vmatpush2.msra.mxu0 0.0
    %1527 = vmatprep.subr.mxu0 0.0
    %1528 = vmatpush2.msra.mxu0 0.0
    %1529 = vmatprep.subr.mxu0 0.0
    %1530 = vmatpush2.msra.mxu0 0.0
    %1531 = vmatprep.subr.mxu0 0.0
    %1532 = vmatpush2.msra.mxu0 0.0
    %1533 = vmatprep.subr.mxu0 0.0
    %1534 = vmatpush2.msra.mxu0 0.0
    %1535 = vmatprep.subr.mxu0 0.0
    %1536 = vmatpush2.msra.mxu0 0.0
    %1537 = vmatprep.subr.mxu0 0.0
    %1538 = vmatpush2.msra.mxu0 0.0
    %1539 = vmatprep.subr.mxu0 0.0
    %1540 = vmatpush2.msra.mxu0 0.0
    %1541 = vmatprep.subr.mxu0 0.0
    %1542 = vmatpush2.msra.mxu0 0.0
    %1543 = vmatprep.subr.mxu0 0.0
    %1544 = vmatpush2.msra.mxu0 0.0
    %1545 = vmatprep.subr.mxu0 0.0
    %1546 = vmatpush2.msra.mxu0 0.0
    %1547 = vmatprep.mubr.f32.mxu0 0.0
    %1548 = vmatmul.mubr.f32.gmra.mxu0 %v1392
    %v1549 = vpop.f32.mrf.mxu0
    %v1550 = vadd.f32 %v1481, %v1549
    %v1551 = vpop.f32.mrf.mxu0
    %1552 = vmatprep.mubr.f32.mxu0 0.0
    %1553 = vmatmul.mubr.f32.gmra.mxu0 %v1395
    %v1554 = vpop.f32.mrf.mxu0
    %v1555 = vadd.f32 %v1481, %v1554
    %v1556 = vpop.f32.mrf.mxu0
    %1557 = vdwg.mxu0
    %v1559 = vsel %vm518, %v1378, 0
    %v1562 = vsel %vm518, %v1464, 0
    %1564 = vmatprep.subr.mxu0 0.0
    %1565 = vmatpush1.xpose.msra.mxu0 0.0
    %1566 = vmatprep.subr.mxu0 0.0
    %1567 = vmatpush1.xpose.msra.mxu0 0.0
    %1568 = vmatprep.subr.mxu0 0.0
    %1569 = vmatpush1.xpose.msra.mxu0 0.0
    %1570 = vmatprep.subr.mxu0 0.0
    %1571 = vmatpush1.xpose.msra.mxu0 0.0
    %1572 = vmatprep.subr.mxu0 0.0
    %1573 = vmatpush1.xpose.msra.mxu0 0.0
    %1574 = vmatprep.subr.mxu0 0.0
    %1575 = vmatpush1.xpose.msra.mxu0 0.0
    %1576 = vmatprep.subr.mxu0 0.0
    %1577 = vmatpush1.xpose.msra.mxu0 0.0
    %1578 = vmatprep.subr.mxu0 0.0
    %1579 = vmatpush1.xpose.msra.mxu0 0.0
    %1580 = vmatprep.subr.mxu0 0.0
    %1581 = vmatpush1.xpose.msra.mxu0 0.0
    %1582 = vmatprep.subr.mxu0 0.0
    %1583 = vmatpush1.xpose.msra.mxu0 0.0
    %1584 = vmatprep.subr.mxu0 0.0
    %1585 = vmatpush1.xpose.msra.mxu0 0.0
    %1586 = vmatprep.subr.mxu0 0.0
    %1587 = vmatpush1.xpose.msra.mxu0 0.0
    %1588 = vmatprep.subr.mxu0 0.0
    %1589 = vmatpush1.xpose.msra.mxu0 0.0
    %1590 = vmatprep.subr.mxu0 0.0
    %1591 = vmatpush1.xpose.msra.mxu0 0.0
    %1592 = vmatprep.subr.mxu0 0.0
    %1593 = vmatpush1.xpose.msra.mxu0 0.0
    %1594 = vmatprep.subr.mxu0 0.0
    %1595 = vmatpush1.xpose.msra.mxu0 %v1562
    %1596 = vmatprep.subr.mxu0 0.0
    %1597 = vmatpush2.xpose.msra.mxu0 0.0
    %1598 = vmatprep.subr.mxu0 0.0
    %1599 = vmatpush2.xpose.msra.mxu0 0.0
    %1600 = vmatprep.subr.mxu0 0.0
    %1601 = vmatpush2.xpose.msra.mxu0 0.0
    %1602 = vmatprep.subr.mxu0 0.0
    %1603 = vmatpush2.xpose.msra.mxu0 0.0
    %1604 = vmatprep.subr.mxu0 0.0
    %1605 = vmatpush2.xpose.msra.mxu0 0.0
    %1606 = vmatprep.subr.mxu0 0.0
    %1607 = vmatpush2.xpose.msra.mxu0 0.0
    %1608 = vmatprep.subr.mxu0 0.0
    %1609 = vmatpush2.xpose.msra.mxu0 0.0
    %1610 = vmatprep.subr.mxu0 0.0
    %1611 = vmatpush2.xpose.msra.mxu0 0.0
    %1612 = vmatprep.subr.mxu0 0.0
    %1613 = vmatpush2.xpose.msra.mxu0 0.0
    %1614 = vmatprep.subr.mxu0 0.0
    %1615 = vmatpush2.xpose.msra.mxu0 0.0
    %1616 = vmatprep.subr.mxu0 0.0
    %1617 = vmatpush2.xpose.msra.mxu0 0.0
    %1618 = vmatprep.subr.mxu0 0.0
    %1619 = vmatpush2.xpose.msra.mxu0 0.0
    %1620 = vmatprep.subr.mxu0 0.0
    %1621 = vmatpush2.xpose.msra.mxu0 0.0
    %1622 = vmatprep.subr.mxu0 0.0
    %1623 = vmatpush2.xpose.msra.mxu0 0.0
    %1624 = vmatprep.subr.mxu0 0.0
    %1625 = vmatpush2.xpose.msra.mxu0 0.0
    %1626 = vmatprep.subr.mxu0 0.0
    %1627 = vmatpush2.xpose.msra.mxu0 0.0
    %1628 = vmatprep.mubr.f32.mxu0 0.0
    %1629 = vmatmul.mubr.f32.gmra.mxu0 %v1559
    %v1630 = vpop.f32.mrf.mxu0
    %v1631 = vadd.f32 0.0, %v1630
    %v1632 = vpop.f32.mrf.mxu0
    %1633 = vdwg.mxu0
    %v1635 = vsel %vm518, %v1379, 0
    %v1638 = vsel %vm518, %v1469, 0
    %1640 = vmatprep.subr.mxu0 0.0
    %1641 = vmatpush1.xpose.msra.mxu0 0.0
    %1642 = vmatprep.subr.mxu0 0.0
    %1643 = vmatpush1.xpose.msra.mxu0 0.0
    %1644 = vmatprep.subr.mxu0 0.0
    %1645 = vmatpush1.xpose.msra.mxu0 0.0
    %1646 = vmatprep.subr.mxu0 0.0
    %1647 = vmatpush1.xpose.msra.mxu0 0.0
    %1648 = vmatprep.subr.mxu0 0.0
    %1649 = vmatpush1.xpose.msra.mxu0 0.0
    %1650 = vmatprep.subr.mxu0 0.0
    %1651 = vmatpush1.xpose.msra.mxu0 0.0
    %1652 = vmatprep.subr.mxu0 0.0
    %1653 = vmatpush1.xpose.msra.mxu0 0.0
    %1654 = vmatprep.subr.mxu0 0.0
    %1655 = vmatpush1.xpose.msra.mxu0 0.0
    %1656 = vmatprep.subr.mxu0 0.0
    %1657 = vmatpush1.xpose.msra.mxu0 0.0
    %1658 = vmatprep.subr.mxu0 0.0
    %1659 = vmatpush1.xpose.msra.mxu0 0.0
    %1660 = vmatprep.subr.mxu0 0.0
    %1661 = vmatpush1.xpose.msra.mxu0 0.0
    %1662 = vmatprep.subr.mxu0 0.0
    %1663 = vmatpush1.xpose.msra.mxu0 0.0
    %1664 = vmatprep.subr.mxu0 0.0
    %1665 = vmatpush1.xpose.msra.mxu0 0.0
    %1666 = vmatprep.subr.mxu0 0.0
    %1667 = vmatpush1.xpose.msra.mxu0 0.0
    %1668 = vmatprep.subr.mxu0 0.0
    %1669 = vmatpush1.xpose.msra.mxu0 0.0
    %1670 = vmatprep.subr.mxu0 0.0
    %1671 = vmatpush1.xpose.msra.mxu0 %v1638
    %1672 = vmatprep.subr.mxu0 0.0
    %1673 = vmatpush2.xpose.msra.mxu0 0.0
    %1674 = vmatprep.subr.mxu0 0.0
    %1675 = vmatpush2.xpose.msra.mxu0 0.0
    %1676 = vmatprep.subr.mxu0 0.0
    %1677 = vmatpush2.xpose.msra.mxu0 0.0
    %1678 = vmatprep.subr.mxu0 0.0
    %1679 = vmatpush2.xpose.msra.mxu0 0.0
    %1680 = vmatprep.subr.mxu0 0.0
    %1681 = vmatpush2.xpose.msra.mxu0 0.0
    %1682 = vmatprep.subr.mxu0 0.0
    %1683 = vmatpush2.xpose.msra.mxu0 0.0
    %1684 = vmatprep.subr.mxu0 0.0
    %1685 = vmatpush2.xpose.msra.mxu0 0.0
    %1686 = vmatprep.subr.mxu0 0.0
    %1687 = vmatpush2.xpose.msra.mxu0 0.0
    %1688 = vmatprep.subr.mxu0 0.0
    %1689 = vmatpush2.xpose.msra.mxu0 0.0
    %1690 = vmatprep.subr.mxu0 0.0
    %1691 = vmatpush2.xpose.msra.mxu0 0.0
    %1692 = vmatprep.subr.mxu0 0.0
    %1693 = vmatpush2.xpose.msra.mxu0 0.0
    %1694 = vmatprep.subr.mxu0 0.0
    %1695 = vmatpush2.xpose.msra.mxu0 0.0
    %1696 = vmatprep.subr.mxu0 0.0
    %1697 = vmatpush2.xpose.msra.mxu0 0.0
    %1698 = vmatprep.subr.mxu0 0.0
    %1699 = vmatpush2.xpose.msra.mxu0 0.0
    %1700 = vmatprep.subr.mxu0 0.0
    %1701 = vmatpush2.xpose.msra.mxu0 0.0
    %1702 = vmatprep.subr.mxu0 0.0
    %1703 = vmatpush2.xpose.msra.mxu0 0.0
    %1704 = vmatprep.mubr.f32.mxu0 0.0
    %1705 = vmatmul.mubr.f32.gmra.mxu0 %v1635
    %v1706 = vpop.f32.mrf.mxu0
    %v1707 = vadd.f32 0.0, %v1706
    %v1708 = vpop.f32.mrf.mxu0
    %1709 = vdwg.mxu0
    %v1710 = vsel %vm675, %v1631, -inf
    %1711 = vmax.xlane.f32.xlu0 %v1710
    %v1712 = vpop.xlane.xlu0 %1711
    %v1713 = vsel %vm675, %v1707, -inf
    %1714 = vmax.xlane.f32.xlu0 %v1713
    %v1715 = vpop.xlane.xlu0 %1714
    %v1716 = vsub.f32 %v1631, %v1712
    %v1717 = vsub.f32 %v1707, %v1715
    %v1718 = vmul.f32 %v1716, 1.442695
    %v1719 = vpow.pop %v1718
    %v1720 = vmul.f32 %v1717, 1.442695
    %v1721 = vpow.pop %v1720
    %v1722 = vsel %vm675, %v1719, 0.0
    %1723 = vadd.xlane.f32.xlu0 %v1722
    %v1724 = vpop.xlane.xlu0 %1723
    %v1725 = vsel %vm675, %v1721, 0.0
    %1726 = vadd.xlane.f32.xlu0 %v1725
    %v1727 = vpop.xlane.xlu0 %1726
    %v1728 = vrcp.pop %v1724
    %v1729 = vrcp.pop %v1727
    %v1730 = vmul.f32 %v1719, %v1728
    %v1731 = vmul.f32 %v1721, %v1729
    %v1733 = vsel %vm675, %v1730, 0
    %1735 = vmatprep.subr.mxu0 0.0
    %1736 = vmatpush1.msra.mxu0 0.0
    %1737 = vmatprep.subr.mxu0 0.0
    %1738 = vmatpush1.msra.mxu0 0.0
    %1739 = vmatprep.subr.mxu0 0.0
    %1740 = vmatpush1.msra.mxu0 0.0
    %1741 = vmatprep.subr.mxu0 0.0
    %1742 = vmatpush1.msra.mxu0 0.0
    %1743 = vmatprep.subr.mxu0 0.0
    %1744 = vmatpush1.msra.mxu0 0.0
    %1745 = vmatprep.subr.mxu0 0.0
    %1746 = vmatpush1.msra.mxu0 0.0
    %1747 = vmatprep.subr.mxu0 0.0
    %1748 = vmatpush1.msra.mxu0 0.0
    %1749 = vmatprep.subr.mxu0 0.0
    %1750 = vmatpush1.msra.mxu0 0.0
    %1751 = vmatprep.subr.mxu0 0.0
    %1752 = vmatpush1.msra.mxu0 0.0
    %1753 = vmatprep.subr.mxu0 0.0
    %1754 = vmatpush1.msra.mxu0 0.0
    %1755 = vmatprep.subr.mxu0 0.0
    %1756 = vmatpush1.msra.mxu0 0.0
    %1757 = vmatprep.subr.mxu0 0.0
    %1758 = vmatpush1.msra.mxu0 0.0
    %1759 = vmatprep.subr.mxu0 0.0
    %1760 = vmatpush1.msra.mxu0 0.0
    %1761 = vmatprep.subr.mxu0 0.0
    %1762 = vmatpush1.msra.mxu0 0.0
    %1763 = vmatprep.subr.mxu0 0.0
    %1764 = vmatpush1.msra.mxu0 0.0
    %1765 = vmatprep.subr.mxu0 0.0
    %1766 = vmatpush1.msra.mxu0 %v1550
    %1767 = vmatprep.subr.mxu0 0.0
    %1768 = vmatpush2.msra.mxu0 0.0
    %1769 = vmatprep.subr.mxu0 0.0
    %1770 = vmatpush2.msra.mxu0 0.0
    %1771 = vmatprep.subr.mxu0 0.0
    %1772 = vmatpush2.msra.mxu0 0.0
    %1773 = vmatprep.subr.mxu0 0.0
    %1774 = vmatpush2.msra.mxu0 0.0
    %1775 = vmatprep.subr.mxu0 0.0
    %1776 = vmatpush2.msra.mxu0 0.0
    %1777 = vmatprep.subr.mxu0 0.0
    %1778 = vmatpush2.msra.mxu0 0.0
    %1779 = vmatprep.subr.mxu0 0.0
    %1780 = vmatpush2.msra.mxu0 0.0
    %1781 = vmatprep.subr.mxu0 0.0
    %1782 = vmatpush2.msra.mxu0 0.0
    %1783 = vmatprep.subr.mxu0 0.0
    %1784 = vmatpush2.msra.mxu0 0.0
    %1785 = vmatprep.subr.mxu0 0.0
    %1786 = vmatpush2.msra.mxu0 0.0
    %1787 = vmatprep.subr.mxu0 0.0
    %1788 = vmatpush2.msra.mxu0 0.0
    %1789 = vmatprep.subr.mxu0 0.0
    %1790 = vmatpush2.msra.mxu0 0.0
    %1791 = vmatprep.subr.mxu0 0.0
    %1792 = vmatpush2.msra.mxu0 0.0
    %1793 = vmatprep.subr.mxu0 0.0
    %1794 = vmatpush2.msra.mxu0 0.0
    %1795 = vmatprep.subr.mxu0 0.0
    %1796 = vmatpush2.msra.mxu0 0.0
    %1797 = vmatprep.subr.mxu0 0.0
    %1798 = vmatpush2.msra.mxu0 0.0
    %1799 = vmatprep.mubr.f32.mxu0 0.0
    %1800 = vmatmul.mubr.f32.gmra.mxu0 %v1733
    %v1801 = vpop.f32.mrf.mxu0
    %v1802 = vadd.f32 0.0, %v1801
    %v1803 = vpop.f32.mrf.mxu0
    %1804 = vdwg.mxu0
    %v1806 = vsel %vm675, %v1731, 0
    %1808 = vmatprep.subr.mxu0 0.0
    %1809 = vmatpush1.msra.mxu0 0.0
    %1810 = vmatprep.subr.mxu0 0.0
    %1811 = vmatpush1.msra.mxu0 0.0
    %1812 = vmatprep.subr.mxu0 0.0
    %1813 = vmatpush1.msra.mxu0 0.0
    %1814 = vmatprep.subr.mxu0 0.0
    %1815 = vmatpush1.msra.mxu0 0.0
    %1816 = vmatprep.subr.mxu0 0.0
    %1817 = vmatpush1.msra.mxu0 0.0
    %1818 = vmatprep.subr.mxu0 0.0
    %1819 = vmatpush1.msra.mxu0 0.0
    %1820 = vmatprep.subr.mxu0 0.0
    %1821 = vmatpush1.msra.mxu0 0.0
    %1822 = vmatprep.subr.mxu0 0.0
    %1823 = vmatpush1.msra.mxu0 0.0
    %1824 = vmatprep.subr.mxu0 0.0
    %1825 = vmatpush1.msra.mxu0 0.0
    %1826 = vmatprep.subr.mxu0 0.0
    %1827 = vmatpush1.msra.mxu0 0.0
    %1828 = vmatprep.subr.mxu0 0.0
    %1829 = vmatpush1.msra.mxu0 0.0
    %1830 = vmatprep.subr.mxu0 0.0
    %1831 = vmatpush1.msra.mxu0 0.0
    %1832 = vmatprep.subr.mxu0 0.0
    %1833 = vmatpush1.msra.mxu0 0.0
    %1834 = vmatprep.subr.mxu0 0.0
    %1835 = vmatpush1.msra.mxu0 0.0
    %1836 = vmatprep.subr.mxu0 0.0
    %1837 = vmatpush1.msra.mxu0 0.0
    %1838 = vmatprep.subr.mxu0 0.0
    %1839 = vmatpush1.msra.mxu0 %v1555
    %1840 = vmatprep.subr.mxu0 0.0
    %1841 = vmatpush2.msra.mxu0 0.0
    %1842 = vmatprep.subr.mxu0 0.0
    %1843 = vmatpush2.msra.mxu0 0.0
    %1844 = vmatprep.subr.mxu0 0.0
    %1845 = vmatpush2.msra.mxu0 0.0
    %1846 = vmatprep.subr.mxu0 0.0
    %1847 = vmatpush2.msra.mxu0 0.0
    %1848 = vmatprep.subr.mxu0 0.0
    %1849 = vmatpush2.msra.mxu0 0.0
    %1850 = vmatprep.subr.mxu0 0.0
    %1851 = vmatpush2.msra.mxu0 0.0
    %1852 = vmatprep.subr.mxu0 0.0
    %1853 = vmatpush2.msra.mxu0 0.0
    %1854 = vmatprep.subr.mxu0 0.0
    %1855 = vmatpush2.msra.mxu0 0.0
    %1856 = vmatprep.subr.mxu0 0.0
    %1857 = vmatpush2.msra.mxu0 0.0
    %1858 = vmatprep.subr.mxu0 0.0
    %1859 = vmatpush2.msra.mxu0 0.0
    %1860 = vmatprep.subr.mxu0 0.0
    %1861 = vmatpush2.msra.mxu0 0.0
    %1862 = vmatprep.subr.mxu0 0.0
    %1863 = vmatpush2.msra.mxu0 0.0
    %1864 = vmatprep.subr.mxu0 0.0
    %1865 = vmatpush2.msra.mxu0 0.0
    %1866 = vmatprep.subr.mxu0 0.0
    %1867 = vmatpush2.msra.mxu0 0.0
    %1868 = vmatprep.subr.mxu0 0.0
    %1869 = vmatpush2.msra.mxu0 0.0
    %1870 = vmatprep.subr.mxu0 0.0
    %1871 = vmatpush2.msra.mxu0 0.0
    %1872 = vmatprep.mubr.f32.mxu0 0.0
    %1873 = vmatmul.mubr.f32.gmra.mxu0 %v1806
    %v1874 = vpop.f32.mrf.mxu0
    %v1875 = vadd.f32 0.0, %v1874
    %v1876 = vpop.f32.mrf.mxu0
    %1877 = vdwg.mxu0
    %1878 = vrot.lane.b32.xlu0 %v1378, 112
    %v1879 = vpop.permute.xlu0 %1878
    %1880 = vrot.lane.b32.xlu0 %v1464, 112
    %v1881 = vpop.permute.xlu0 %1880
    %v1882 = vsel %vm518, %v1879, 0
    %v1884 = vsel %vm518, %v1881, 0
    %1886 = vmatprep.subr.mxu0 0.0
    %1887 = vmatpush1.xpose.msra.mxu0 0.0
    %1888 = vmatprep.subr.mxu0 0.0
    %1889 = vmatpush1.xpose.msra.mxu0 0.0
    %1890 = vmatprep.subr.mxu0 0.0
    %1891 = vmatpush1.xpose.msra.mxu0 0.0
    %1892 = vmatprep.subr.mxu0 0.0
    %1893 = vmatpush1.xpose.msra.mxu0 0.0
    %1894 = vmatprep.subr.mxu0 0.0
    %1895 = vmatpush1.xpose.msra.mxu0 0.0
    %1896 = vmatprep.subr.mxu0 0.0
    %1897 = vmatpush1.xpose.msra.mxu0 0.0
    %1898 = vmatprep.subr.mxu0 0.0
    %1899 = vmatpush1.xpose.msra.mxu0 0.0
    %1900 = vmatprep.subr.mxu0 0.0
    %1901 = vmatpush1.xpose.msra.mxu0 0.0
    %1902 = vmatprep.subr.mxu0 0.0
    %1903 = vmatpush1.xpose.msra.mxu0 0.0
    %1904 = vmatprep.subr.mxu0 0.0
    %1905 = vmatpush1.xpose.msra.mxu0 0.0
    %1906 = vmatprep.subr.mxu0 0.0
    %1907 = vmatpush1.xpose.msra.mxu0 0.0
    %1908 = vmatprep.subr.mxu0 0.0
    %1909 = vmatpush1.xpose.msra.mxu0 0.0
    %1910 = vmatprep.subr.mxu0 0.0
    %1911 = vmatpush1.xpose.msra.mxu0 0.0
    %1912 = vmatprep.subr.mxu0 0.0
    %1913 = vmatpush1.xpose.msra.mxu0 0.0
    %1914 = vmatprep.subr.mxu0 0.0
    %1915 = vmatpush1.xpose.msra.mxu0 0.0
    %1916 = vmatprep.subr.mxu0 0.0
    %1917 = vmatpush1.xpose.msra.mxu0 %v1884
    %1918 = vmatprep.subr.mxu0 0.0
    %1919 = vmatpush2.xpose.msra.mxu0 0.0
    %1920 = vmatprep.subr.mxu0 0.0
    %1921 = vmatpush2.xpose.msra.mxu0 0.0
    %1922 = vmatprep.subr.mxu0 0.0
    %1923 = vmatpush2.xpose.msra.mxu0 0.0
    %1924 = vmatprep.subr.mxu0 0.0
    %1925 = vmatpush2.xpose.msra.mxu0 0.0
    %1926 = vmatprep.subr.mxu0 0.0
    %1927 = vmatpush2.xpose.msra.mxu0 0.0
    %1928 = vmatprep.subr.mxu0 0.0
    %1929 = vmatpush2.xpose.msra.mxu0 0.0
    %1930 = vmatprep.subr.mxu0 0.0
    %1931 = vmatpush2.xpose.msra.mxu0 0.0
    %1932 = vmatprep.subr.mxu0 0.0
    %1933 = vmatpush2.xpose.msra.mxu0 0.0
    %1934 = vmatprep.subr.mxu0 0.0
    %1935 = vmatpush2.xpose.msra.mxu0 0.0
    %1936 = vmatprep.subr.mxu0 0.0
    %1937 = vmatpush2.xpose.msra.mxu0 0.0
    %1938 = vmatprep.subr.mxu0 0.0
    %1939 = vmatpush2.xpose.msra.mxu0 0.0
    %1940 = vmatprep.subr.mxu0 0.0
    %1941 = vmatpush2.xpose.msra.mxu0 0.0
    %1942 = vmatprep.subr.mxu0 0.0
    %1943 = vmatpush2.xpose.msra.mxu0 0.0
    %1944 = vmatprep.subr.mxu0 0.0
    %1945 = vmatpush2.xpose.msra.mxu0 0.0
    %1946 = vmatprep.subr.mxu0 0.0
    %1947 = vmatpush2.xpose.msra.mxu0 0.0
    %1948 = vmatprep.subr.mxu0 0.0
    %1949 = vmatpush2.xpose.msra.mxu0 0.0
    %1950 = vmatprep.mubr.f32.mxu0 0.0
    %1951 = vmatmul.mubr.f32.gmra.mxu0 %v1882
    %v1952 = vpop.f32.mrf.mxu0
    %v1953 = vadd.f32 0.0, %v1952
    %v1954 = vpop.f32.mrf.mxu0
    %1955 = vdwg.mxu0
    %1956 = vrot.lane.b32.xlu0 %v1379, 112
    %v1957 = vpop.permute.xlu0 %1956
    %1958 = vrot.lane.b32.xlu0 %v1469, 112
    %v1959 = vpop.permute.xlu0 %1958
    %v1960 = vsel %vm518, %v1957, 0
    %v1962 = vsel %vm518, %v1959, 0
    %1964 = vmatprep.subr.mxu0 0.0
    %1965 = vmatpush1.xpose.msra.mxu0 0.0
    %1966 = vmatprep.subr.mxu0 0.0
    %1967 = vmatpush1.xpose.msra.mxu0 0.0
    %1968 = vmatprep.subr.mxu0 0.0
    %1969 = vmatpush1.xpose.msra.mxu0 0.0
    %1970 = vmatprep.subr.mxu0 0.0
    %1971 = vmatpush1.xpose.msra.mxu0 0.0
    %1972 = vmatprep.subr.mxu0 0.0
    %1973 = vmatpush1.xpose.msra.mxu0 0.0
    %1974 = vmatprep.subr.mxu0 0.0
    %1975 = vmatpush1.xpose.msra.mxu0 0.0
    %1976 = vmatprep.subr.mxu0 0.0
    %1977 = vmatpush1.xpose.msra.mxu0 0.0
    %1978 = vmatprep.subr.mxu0 0.0
    %1979 = vmatpush1.xpose.msra.mxu0 0.0
    %1980 = vmatprep.subr.mxu0 0.0
    %1981 = vmatpush1.xpose.msra.mxu0 0.0
    %1982 = vmatprep.subr.mxu0 0.0
    %1983 = vmatpush1.xpose.msra.mxu0 0.0
    %1984 = vmatprep.subr.mxu0 0.0
    %1985 = vmatpush1.xpose.msra.mxu0 0.0
    %1986 = vmatprep.subr.mxu0 0.0
    %1987 = vmatpush1.xpose.msra.mxu0 0.0
    %1988 = vmatprep.subr.mxu0 0.0
    %1989 = vmatpush1.xpose.msra.mxu0 0.0
    %1990 = vmatprep.subr.mxu0 0.0
    %1991 = vmatpush1.xpose.msra.mxu0 0.0
    %1992 = vmatprep.subr.mxu0 0.0
    %1993 = vmatpush1.xpose.msra.mxu0 0.0
    %1994 = vmatprep.subr.mxu0 0.0
    %1995 = vmatpush1.xpose.msra.mxu0 %v1962
    %1996 = vmatprep.subr.mxu0 0.0
    %1997 = vmatpush2.xpose.msra.mxu0 0.0
    %1998 = vmatprep.subr.mxu0 0.0
    %1999 = vmatpush2.xpose.msra.mxu0 0.0
    %2000 = vmatprep.subr.mxu0 0.0
    %2001 = vmatpush2.xpose.msra.mxu0 0.0
    %2002 = vmatprep.subr.mxu0 0.0
    %2003 = vmatpush2.xpose.msra.mxu0 0.0
    %2004 = vmatprep.subr.mxu0 0.0
    %2005 = vmatpush2.xpose.msra.mxu0 0.0
    %2006 = vmatprep.subr.mxu0 0.0
    %2007 = vmatpush2.xpose.msra.mxu0 0.0
    %2008 = vmatprep.subr.mxu0 0.0
    %2009 = vmatpush2.xpose.msra.mxu0 0.0
    %2010 = vmatprep.subr.mxu0 0.0
    %2011 = vmatpush2.xpose.msra.mxu0 0.0
    %2012 = vmatprep.subr.mxu0 0.0
    %2013 = vmatpush2.xpose.msra.mxu0 0.0
    %2014 = vmatprep.subr.mxu0 0.0
    %2015 = vmatpush2.xpose.msra.mxu0 0.0
    %2016 = vmatprep.subr.mxu0 0.0
    %2017 = vmatpush2.xpose.msra.mxu0 0.0
    %2018 = vmatprep.subr.mxu0 0.0
    %2019 = vmatpush2.xpose.msra.mxu0 0.0
    %2020 = vmatprep.subr.mxu0 0.0
    %2021 = vmatpush2.xpose.msra.mxu0 0.0
    %2022 = vmatprep.subr.mxu0 0.0
    %2023 = vmatpush2.xpose.msra.mxu0 0.0
    %2024 = vmatprep.subr.mxu0 0.0
    %2025 = vmatpush2.xpose.msra.mxu0 0.0
    %2026 = vmatprep.subr.mxu0 0.0
    %2027 = vmatpush2.xpose.msra.mxu0 0.0
    %2028 = vmatprep.mubr.f32.mxu0 0.0
    %2029 = vmatmul.mubr.f32.gmra.mxu0 %v1960
    %v2030 = vpop.f32.mrf.mxu0
    %v2031 = vadd.f32 0.0, %v2030
    %v2032 = vpop.f32.mrf.mxu0
    %2033 = vdwg.mxu0
    %v2034 = vsel %vm675, %v1953, -inf
    %2035 = vmax.xlane.f32.xlu0 %v2034
    %v2036 = vpop.xlane.xlu0 %2035
    %v2037 = vsel %vm675, %v2031, -inf
    %2038 = vmax.xlane.f32.xlu0 %v2037
    %v2039 = vpop.xlane.xlu0 %2038
    %v2040 = vsub.f32 %v1953, %v2036
    %v2041 = vsub.f32 %v2031, %v2039
    %v2042 = vmul.f32 %v2040, 1.442695
    %v2043 = vpow.pop %v2042
    %v2044 = vmul.f32 %v2041, 1.442695
    %v2045 = vpow.pop %v2044
    %v2046 = vsel %vm675, %v2043, 0.0
    %2047 = vadd.xlane.f32.xlu0 %v2046
    %v2048 = vpop.xlane.xlu0 %2047
    %v2049 = vsel %vm675, %v2045, 0.0
    %2050 = vadd.xlane.f32.xlu0 %v2049
    %v2051 = vpop.xlane.xlu0 %2050
    %v2052 = vrcp.pop %v2048
    %v2053 = vrcp.pop %v2051
    %v2054 = vmul.f32 %v2043, %v2052
    %v2055 = vmul.f32 %v2045, %v2053
    %2057 = vrot.lane.b32.xlu0 %v1550, 112
    %v2058 = vpop.permute.xlu0 %2057
    %v2061 = vsel %vm675, %v2054, 0
    %2063 = vmatprep.subr.mxu0 0.0
    %2064 = vmatpush1.msra.mxu0 0.0
    %2065 = vmatprep.subr.mxu0 0.0
    %2066 = vmatpush1.msra.mxu0 0.0
    %2067 = vmatprep.subr.mxu0 0.0
    %2068 = vmatpush1.msra.mxu0 0.0
    %2069 = vmatprep.subr.mxu0 0.0
    %2070 = vmatpush1.msra.mxu0 0.0
    %2071 = vmatprep.subr.mxu0 0.0
    %2072 = vmatpush1.msra.mxu0 0.0
    %2073 = vmatprep.subr.mxu0 0.0
    %2074 = vmatpush1.msra.mxu0 0.0
    %2075 = vmatprep.subr.mxu0 0.0
    %2076 = vmatpush1.msra.mxu0 0.0
    %2077 = vmatprep.subr.mxu0 0.0
    %2078 = vmatpush1.msra.mxu0 0.0
    %2079 = vmatprep.subr.mxu0 0.0
    %2080 = vmatpush1.msra.mxu0 0.0
    %2081 = vmatprep.subr.mxu0 0.0
    %2082 = vmatpush1.msra.mxu0 0.0
    %2083 = vmatprep.subr.mxu0 0.0
    %2084 = vmatpush1.msra.mxu0 0.0
    %2085 = vmatprep.subr.mxu0 0.0
    %2086 = vmatpush1.msra.mxu0 0.0
    %2087 = vmatprep.subr.mxu0 0.0
    %2088 = vmatpush1.msra.mxu0 0.0
    %2089 = vmatprep.subr.mxu0 0.0
    %2090 = vmatpush1.msra.mxu0 0.0
    %2091 = vmatprep.subr.mxu0 0.0
    %2092 = vmatpush1.msra.mxu0 0.0
    %2093 = vmatprep.subr.mxu0 0.0
    %2094 = vmatpush1.msra.mxu0 %v2058
    %2095 = vmatprep.subr.mxu0 0.0
    %2096 = vmatpush2.msra.mxu0 0.0
    %2097 = vmatprep.subr.mxu0 0.0
    %2098 = vmatpush2.msra.mxu0 0.0
    %2099 = vmatprep.subr.mxu0 0.0
    %2100 = vmatpush2.msra.mxu0 0.0
    %2101 = vmatprep.subr.mxu0 0.0
    %2102 = vmatpush2.msra.mxu0 0.0
    %2103 = vmatprep.subr.mxu0 0.0
    %2104 = vmatpush2.msra.mxu0 0.0
    %2105 = vmatprep.subr.mxu0 0.0
    %2106 = vmatpush2.msra.mxu0 0.0
    %2107 = vmatprep.subr.mxu0 0.0
    %2108 = vmatpush2.msra.mxu0 0.0
    %2109 = vmatprep.subr.mxu0 0.0
    %2110 = vmatpush2.msra.mxu0 0.0
    %2111 = vmatprep.subr.mxu0 0.0
    %2112 = vmatpush2.msra.mxu0 0.0
    %2113 = vmatprep.subr.mxu0 0.0
    %2114 = vmatpush2.msra.mxu0 0.0
    %2115 = vmatprep.subr.mxu0 0.0
    %2116 = vmatpush2.msra.mxu0 0.0
    %2117 = vmatprep.subr.mxu0 0.0
    %2118 = vmatpush2.msra.mxu0 0.0
    %2119 = vmatprep.subr.mxu0 0.0
    %2120 = vmatpush2.msra.mxu0 0.0
    %2121 = vmatprep.subr.mxu0 0.0
    %2122 = vmatpush2.msra.mxu0 0.0
    %2123 = vmatprep.subr.mxu0 0.0
    %2124 = vmatpush2.msra.mxu0 0.0
    %2125 = vmatprep.subr.mxu0 0.0
    %2126 = vmatpush2.msra.mxu0 0.0
    %2127 = vmatprep.mubr.f32.mxu0 0.0
    %2128 = vmatmul.mubr.f32.gmra.mxu0 %v2061
    %v2129 = vpop.f32.mrf.mxu0
    %v2130 = vadd.f32 0.0, %v2129
    %v2131 = vpop.f32.mrf.mxu0
    %2132 = vdwg.mxu0
    %2134 = vrot.lane.b32.xlu0 %v1555, 112
    %v2135 = vpop.permute.xlu0 %2134
    %v2138 = vsel %vm675, %v2055, 0
    %2140 = vmatprep.subr.mxu0 0.0
    %2141 = vmatpush1.msra.mxu0 0.0
    %2142 = vmatprep.subr.mxu0 0.0
    %2143 = vmatpush1.msra.mxu0 0.0
    %2144 = vmatprep.subr.mxu0 0.0
    %2145 = vmatpush1.msra.mxu0 0.0
    %2146 = vmatprep.subr.mxu0 0.0
    %2147 = vmatpush1.msra.mxu0 0.0
    %2148 = vmatprep.subr.mxu0 0.0
    %2149 = vmatpush1.msra.mxu0 0.0
    %2150 = vmatprep.subr.mxu0 0.0
    %2151 = vmatpush1.msra.mxu0 0.0
    %2152 = vmatprep.subr.mxu0 0.0
    %2153 = vmatpush1.msra.mxu0 0.0
    %2154 = vmatprep.subr.mxu0 0.0
    %2155 = vmatpush1.msra.mxu0 0.0
    %2156 = vmatprep.subr.mxu0 0.0
    %2157 = vmatpush1.msra.mxu0 0.0
    %2158 = vmatprep.subr.mxu0 0.0
    %2159 = vmatpush1.msra.mxu0 0.0
    %2160 = vmatprep.subr.mxu0 0.0
    %2161 = vmatpush1.msra.mxu0 0.0
    %2162 = vmatprep.subr.mxu0 0.0
    %2163 = vmatpush1.msra.mxu0 0.0
    %2164 = vmatprep.subr.mxu0 0.0
    %2165 = vmatpush1.msra.mxu0 0.0
    %2166 = vmatprep.subr.mxu0 0.0
    %2167 = vmatpush1.msra.mxu0 0.0
    %2168 = vmatprep.subr.mxu0 0.0
    %2169 = vmatpush1.msra.mxu0 0.0
    %2170 = vmatprep.subr.mxu0 0.0
    %2171 = vmatpush1.msra.mxu0 %v2135
    %2172 = vmatprep.subr.mxu0 0.0
    %2173 = vmatpush2.msra.mxu0 0.0
    %2174 = vmatprep.subr.mxu0 0.0
    %2175 = vmatpush2.msra.mxu0 0.0
    %2176 = vmatprep.subr.mxu0 0.0
    %2177 = vmatpush2.msra.mxu0 0.0
    %2178 = vmatprep.subr.mxu0 0.0
    %2179 = vmatpush2.msra.mxu0 0.0
    %2180 = vmatprep.subr.mxu0 0.0
    %2181 = vmatpush2.msra.mxu0 0.0
    %2182 = vmatprep.subr.mxu0 0.0
    %2183 = vmatpush2.msra.mxu0 0.0
    %2184 = vmatprep.subr.mxu0 0.0
    %2185 = vmatpush2.msra.mxu0 0.0
    %2186 = vmatprep.subr.mxu0 0.0
    %2187 = vmatpush2.msra.mxu0 0.0
    %2188 = vmatprep.subr.mxu0 0.0
    %2189 = vmatpush2.msra.mxu0 0.0
    %2190 = vmatprep.subr.mxu0 0.0
    %2191 = vmatpush2.msra.mxu0 0.0
    %2192 = vmatprep.subr.mxu0 0.0
    %2193 = vmatpush2.msra.mxu0 0.0
    %2194 = vmatprep.subr.mxu0 0.0
    %2195 = vmatpush2.msra.mxu0 0.0
    %2196 = vmatprep.subr.mxu0 0.0
    %2197 = vmatpush2.msra.mxu0 0.0
    %2198 = vmatprep.subr.mxu0 0.0
    %2199 = vmatpush2.msra.mxu0 0.0
    %2200 = vmatprep.subr.mxu0 0.0
    %2201 = vmatpush2.msra.mxu0 0.0
    %2202 = vmatprep.subr.mxu0 0.0
    %2203 = vmatpush2.msra.mxu0 0.0
    %2204 = vmatprep.mubr.f32.mxu0 0.0
    %2205 = vmatmul.mubr.f32.gmra.mxu0 %v2138
    %v2206 = vpop.f32.mrf.mxu0
    %v2207 = vadd.f32 0.0, %v2206
    %v2208 = vpop.f32.mrf.mxu0
    %2209 = vdwg.mxu0
    %2210 = vst.msk [vmem:[#allocation26] sm:$0xff] %vm675, %v1730
    %2211 = vst.msk [vmem:[#allocation26 + $0x8] sm:$0xff] %vm675, %v1731
    %2212 = vst.msk [vmem:[#allocation26 + $0x10] sm:$0xff] %vm675, %v2054
    %2213 = vst.msk [vmem:[#allocation26 + $0x18] sm:$0xff] %vm675, %v2055
    %2216 = vrot.lane.b32.xlu0 %v2130, 16
    %v2217 = vpop.permute.xlu0 %2216
    %2218 = vrot.lane.b32.xlu0 %v2207, 16
    %v2219 = vpop.permute.xlu0 %2218
    %v2222 = vsel %vm518, %v1802, %v2217
    %v2223 = vsel %vm518, %v1875, %v2219
    %v2224 = vld [vmem:[#allocation17] sm:$0xff]
    %v2225 = vld [vmem:[#allocation17 + $0x8] sm:$0xff]
    %v2226 = vld [vmem:[#allocation17 + $0x10] sm:$0xff]
    %v2227 = vld [vmem:[#allocation17 + $0x18] sm:$0xff]
    %v2228 = vld [vmem:[#allocation19] sm:$0x1]
    %v2230 = vlaneseq
    %v2231 = vshrl.u32 %v2230, 7
    %v2232 = vsub.s32 0, %v2231
    %v2233 = vrot.slane %v2228, %v2232
    %v2236 = vsel %vm262, %v2222, 0
    %v2239 = vsel %vm262, %v2223, 0
    %2241 = vmatprep.subr.mxu0 0.0
    %2242 = vmatpush1.msra.mxu0 0.0
    %2243 = vmatprep.subr.mxu0 0.0
    %2244 = vmatpush1.msra.mxu0 0.0
    %2245 = vmatprep.subr.mxu0 0.0
    %2246 = vmatpush1.msra.mxu0 0.0
    %2247 = vmatprep.subr.mxu0 0.0
    %2248 = vmatpush1.msra.mxu0 0.0
    %2249 = vmatprep.subr.mxu0 0.0
    %2250 = vmatpush1.msra.mxu0 0.0
    %2251 = vmatprep.subr.mxu0 0.0
    %2252 = vmatpush1.msra.mxu0 0.0
    %2253 = vmatprep.subr.mxu0 0.0
    %2254 = vmatpush1.msra.mxu0 0.0
    %2255 = vmatprep.subr.mxu0 0.0
    %2256 = vmatpush1.msra.mxu0 0.0
    %2257 = vmatprep.subr.mxu0 0.0
    %2258 = vmatpush1.msra.mxu0 0.0
    %2259 = vmatprep.subr.mxu0 0.0
    %2260 = vmatpush1.msra.mxu0 0.0
    %2261 = vmatprep.subr.mxu0 0.0
    %2262 = vmatpush1.msra.mxu0 0.0
    %2263 = vmatprep.subr.mxu0 0.0
    %2264 = vmatpush1.msra.mxu0 0.0
    %2265 = vmatprep.subr.mxu0 0.0
    %2266 = vmatpush1.msra.mxu0 %v2227
    %2267 = vmatprep.subr.mxu0 0.0
    %2268 = vmatpush1.msra.mxu0 %v2226
    %2269 = vmatprep.subr.mxu0 0.0
    %2270 = vmatpush1.msra.mxu0 %v2225
    %2271 = vmatprep.subr.mxu0 0.0
    %2272 = vmatpush1.msra.mxu0 %v2224
    %2273 = vmatprep.subr.mxu0 0.0
    %2274 = vmatpush2.msra.mxu0 0.0
    %2275 = vmatprep.subr.mxu0 0.0
    %2276 = vmatpush2.msra.mxu0 0.0
    %2277 = vmatprep.subr.mxu0 0.0
    %2278 = vmatpush2.msra.mxu0 0.0
    %2279 = vmatprep.subr.mxu0 0.0
    %2280 = vmatpush2.msra.mxu0 0.0
    %2281 = vmatprep.subr.mxu0 0.0
    %2282 = vmatpush2.msra.mxu0 0.0
    %2283 = vmatprep.subr.mxu0 0.0
    %2284 = vmatpush2.msra.mxu0 0.0
    %2285 = vmatprep.subr.mxu0 0.0
    %2286 = vmatpush2.msra.mxu0 0.0
    %2287 = vmatprep.subr.mxu0 0.0
    %2288 = vmatpush2.msra.mxu0 0.0
    %2289 = vmatprep.subr.mxu0 0.0
    %2290 = vmatpush2.msra.mxu0 0.0
    %2291 = vmatprep.subr.mxu0 0.0
    %2292 = vmatpush2.msra.mxu0 0.0
    %2293 = vmatprep.subr.mxu0 0.0
    %2294 = vmatpush2.msra.mxu0 0.0
    %2295 = vmatprep.subr.mxu0 0.0
    %2296 = vmatpush2.msra.mxu0 0.0
    %2297 = vmatprep.subr.mxu0 0.0
    %2298 = vmatpush2.msra.mxu0 0.0
    %2299 = vmatprep.subr.mxu0 0.0
    %2300 = vmatpush2.msra.mxu0 0.0
    %2301 = vmatprep.subr.mxu0 0.0
    %2302 = vmatpush2.msra.mxu0 0.0
    %2303 = vmatprep.subr.mxu0 0.0
    %2304 = vmatpush2.msra.mxu0 0.0
    %2305 = vmatprep.mubr.f32.mxu0 0.0
    %2306 = vmatmul.mubr.f32.gmra.mxu0 %v2236
    %v2307 = vpop.f32.mrf.mxu0
    %v2308 = vadd.f32 %v2233, %v2307
    %v2309 = vpop.f32.mrf.mxu0
    %2310 = vmatprep.mubr.f32.mxu0 0.0
    %2311 = vmatmul.mubr.f32.gmra.mxu0 %v2239
    %v2312 = vpop.f32.mrf.mxu0
    %v2313 = vadd.f32 %v2233, %v2312
    %v2314 = vpop.f32.mrf.mxu0
    %2315 = vdwg.mxu0
    %v2316 = vadd.f32 %v2308, %v1284
    %v2317 = vadd.f32 %v2313, %v1285
    %v2318 = vld [vmem:[#allocation20] sm:$0xff]
    %v2319 = vld [vmem:[#allocation20 + $0x8] sm:$0xff]
    %v2320 = vld [vmem:[#allocation20 + $0x10] sm:$0xff]
    %v2321 = vld [vmem:[#allocation20 + $0x18] sm:$0xff]
    %v2322 = vld [vmem:[#allocation22] sm:$0x1]
    %v2324 = vlaneseq
    %v2325 = vshrl.u32 %v2324, 7
    %v2326 = vsub.s32 0, %v2325
    %v2327 = vrot.slane %v2322, %v2326
    %v2330 = vsel %vm262, %v2316, 0
    %v2333 = vsel %vm262, %v2317, 0
    %2335 = vmatprep.subr.mxu0 0.0
    %2336 = vmatpush1.msra.mxu0 0.0
    %2337 = vmatprep.subr.mxu0 0.0
    %2338 = vmatpush1.msra.mxu0 0.0
    %2339 = vmatprep.subr.mxu0 0.0
    %2340 = vmatpush1.msra.mxu0 0.0
    %2341 = vmatprep.subr.mxu0 0.0
    %2342 = vmatpush1.msra.mxu0 0.0
    %2343 = vmatprep.subr.mxu0 0.0
    %2344 = vmatpush1.msra.mxu0 0.0
    %2345 = vmatprep.subr.mxu0 0.0
    %2346 = vmatpush1.msra.mxu0 0.0
    %2347 = vmatprep.subr.mxu0 0.0
    %2348 = vmatpush1.msra.mxu0 0.0
    %2349 = vmatprep.subr.mxu0 0.0
    %2350 = vmatpush1.msra.mxu0 0.0
    %2351 = vmatprep.subr.mxu0 0.0
    %2352 = vmatpush1.msra.mxu0 0.0
    %2353 = vmatprep.subr.mxu0 0.0
    %2354 = vmatpush1.msra.mxu0 0.0
    %2355 = vmatprep.subr.mxu0 0.0
    %2356 = vmatpush1.msra.mxu0 0.0
    %2357 = vmatprep.subr.mxu0 0.0
    %2358 = vmatpush1.msra.mxu0 0.0
    %2359 = vmatprep.subr.mxu0 0.0
    %2360 = vmatpush1.msra.mxu0 %v2321
    %2361 = vmatprep.subr.mxu0 0.0
    %2362 = vmatpush1.msra.mxu0 %v2320
    %2363 = vmatprep.subr.mxu0 0.0
    %2364 = vmatpush1.msra.mxu0 %v2319
    %2365 = vmatprep.subr.mxu0 0.0
    %2366 = vmatpush1.msra.mxu0 %v2318
    %2367 = vmatprep.subr.mxu0 0.0
    %2368 = vmatpush2.msra.mxu0 0.0
    %2369 = vmatprep.subr.mxu0 0.0
    %2370 = vmatpush2.msra.mxu0 0.0
    %2371 = vmatprep.subr.mxu0 0.0
    %2372 = vmatpush2.msra.mxu0 0.0
    %2373 = vmatprep.subr.mxu0 0.0
    %2374 = vmatpush2.msra.mxu0 0.0
    %2375 = vmatprep.subr.mxu0 0.0
    %2376 = vmatpush2.msra.mxu0 0.0
    %2377 = vmatprep.subr.mxu0 0.0
    %2378 = vmatpush2.msra.mxu0 0.0
    %2379 = vmatprep.subr.mxu0 0.0
    %2380 = vmatpush2.msra.mxu0 0.0
    %2381 = vmatprep.subr.mxu0 0.0
    %2382 = vmatpush2.msra.mxu0 0.0
    %2383 = vmatprep.subr.mxu0 0.0
    %2384 = vmatpush2.msra.mxu0 0.0
    %2385 = vmatprep.subr.mxu0 0.0
    %2386 = vmatpush2.msra.mxu0 0.0
    %2387 = vmatprep.subr.mxu0 0.0
    %2388 = vmatpush2.msra.mxu0 0.0
    %2389 = vmatprep.subr.mxu0 0.0
    %2390 = vmatpush2.msra.mxu0 0.0
    %2391 = vmatprep.subr.mxu0 0.0
    %2392 = vmatpush2.msra.mxu0 0.0
    %2393 = vmatprep.subr.mxu0 0.0
    %2394 = vmatpush2.msra.mxu0 0.0
    %2395 = vmatprep.subr.mxu0 0.0
    %2396 = vmatpush2.msra.mxu0 0.0
    %2397 = vmatprep.subr.mxu0 0.0
    %2398 = vmatpush2.msra.mxu0 0.0
    %2399 = vmatprep.mubr.f32.mxu0 0.0
    %2400 = vmatmul.mubr.f32.gmra.mxu0 %v2330
    %v2401 = vpop.f32.mrf.mxu0
    %v2402 = vadd.f32 %v2327, %v2401
    %v2403 = vpop.f32.mrf.mxu0
    %2404 = vmatprep.mubr.f32.mxu0 0.0
    %2405 = vmatmul.mubr.f32.gmra.mxu0 %v2333
    %v2406 = vpop.f32.mrf.mxu0
    %v2407 = vadd.f32 %v2327, %v2406
    %v2408 = vpop.f32.mrf.mxu0
    %2409 = vdwg.mxu0
    %v2410 = vmax.f32 %v2402, 0.0
    %v2411 = vmax.f32 %v2407, 0.0
    %v2412 = vld [vmem:[%s20] sm:$0xff]
    %v2413 = vld [vmem:[%s20 + $0x8] sm:$0xff]
    %v2414 = vld [vmem:[%s20 + $0x10] sm:$0xff]
    %v2415 = vld [vmem:[%s20 + $0x18] sm:$0xff]
    %v2416 = vld [vmem:[%s20 + $0x20] sm:$0xff]
    %v2417 = vld [vmem:[%s20 + $0x28] sm:$0xff]
    %v2418 = vld [vmem:[%s20 + $0x30] sm:$0xff]
    %v2419 = vld [vmem:[%s20 + $0x38] sm:$0xff]
    %v2420 = vld [vmem:[%s21] sm:$0x1]
    %v2422 = vlaneseq
    %v2423 = vshrl.u32 %v2422, 7
    %v2424 = vsub.s32 0, %v2423
    %v2425 = vrot.slane %v2420, %v2424
    %vm2427 = vcmask 523264
    %v2429 = vsel %vm2427, %v2410, 0
    %v2432 = vsel %vm2427, %v2411, 0
    %2434 = vmatprep.subr.mxu0 0.0
    %2435 = vmatpush1.msra.mxu0 0.0
    %2436 = vmatprep.subr.mxu0 0.0
    %2437 = vmatpush1.msra.mxu0 0.0
    %2438 = vmatprep.subr.mxu0 0.0
    %2439 = vmatpush1.msra.mxu0 0.0
    %2440 = vmatprep.subr.mxu0 0.0
    %2441 = vmatpush1.msra.mxu0 0.0
    %2442 = vmatprep.subr.mxu0 0.0
    %2443 = vmatpush1.msra.mxu0 0.0
    %2444 = vmatprep.subr.mxu0 0.0
    %2445 = vmatpush1.msra.mxu0 0.0
    %2446 = vmatprep.subr.mxu0 0.0
    %2447 = vmatpush1.msra.mxu0 0.0
    %2448 = vmatprep.subr.mxu0 0.0
    %2449 = vmatpush1.msra.mxu0 0.0
    %2450 = vmatprep.subr.mxu0 0.0
    %2451 = vmatpush1.msra.mxu0 %v2419
    %2452 = vmatprep.subr.mxu0 0.0
    %2453 = vmatpush1.msra.mxu0 %v2418
    %2454 = vmatprep.subr.mxu0 0.0
    %2455 = vmatpush1.msra.mxu0 %v2417
    %2456 = vmatprep.subr.mxu0 0.0
    %2457 = vmatpush1.msra.mxu0 %v2416
    %2458 = vmatprep.subr.mxu0 0.0
    %2459 = vmatpush1.msra.mxu0 %v2415
    %2460 = vmatprep.subr.mxu0 0.0
    %2461 = vmatpush1.msra.mxu0 %v2414
    %2462 = vmatprep.subr.mxu0 0.0
    %2463 = vmatpush1.msra.mxu0 %v2413
    %2464 = vmatprep.subr.mxu0 0.0
    %2465 = vmatpush1.msra.mxu0 %v2412
    %2466 = vmatprep.subr.mxu0 0.0
    %2467 = vmatpush2.msra.mxu0 0.0
    %2468 = vmatprep.subr.mxu0 0.0
    %2469 = vmatpush2.msra.mxu0 0.0
    %2470 = vmatprep.subr.mxu0 0.0
    %2471 = vmatpush2.msra.mxu0 0.0
    %2472 = vmatprep.subr.mxu0 0.0
    %2473 = vmatpush2.msra.mxu0 0.0
    %2474 = vmatprep.subr.mxu0 0.0
    %2475 = vmatpush2.msra.mxu0 0.0
    %2476 = vmatprep.subr.mxu0 0.0
    %2477 = vmatpush2.msra.mxu0 0.0
    %2478 = vmatprep.subr.mxu0 0.0
    %2479 = vmatpush2.msra.mxu0 0.0
    %2480 = vmatprep.subr.mxu0 0.0
    %2481 = vmatpush2.msra.mxu0 0.0
    %2482 = vmatprep.subr.mxu0 0.0
    %2483 = vmatpush2.msra.mxu0 0.0
    %2484 = vmatprep.subr.mxu0 0.0
    %2485 = vmatpush2.msra.mxu0 0.0
    %2486 = vmatprep.subr.mxu0 0.0
    %2487 = vmatpush2.msra.mxu0 0.0
    %2488 = vmatprep.subr.mxu0 0.0
    %2489 = vmatpush2.msra.mxu0 0.0
    %2490 = vmatprep.subr.mxu0 0.0
    %2491 = vmatpush2.msra.mxu0 0.0
    %2492 = vmatprep.subr.mxu0 0.0
    %2493 = vmatpush2.msra.mxu0 0.0
    %2494 = vmatprep.subr.mxu0 0.0
    %2495 = vmatpush2.msra.mxu0 0.0
    %2496 = vmatprep.subr.mxu0 0.0
    %2497 = vmatpush2.msra.mxu0 0.0
    %2498 = vmatprep.mubr.f32.mxu0 0.0
    %2499 = vmatmul.mubr.f32.gmra.mxu0 %v2429
    %v2500 = vpop.f32.mrf.mxu0
    %v2501 = vadd.f32 %v2425, %v2500
    %v2502 = vpop.f32.mrf.mxu0
    %2503 = vmatprep.mubr.f32.mxu0 0.0
    %2504 = vmatmul.mubr.f32.gmra.mxu0 %v2432
    %v2505 = vpop.f32.mrf.mxu0
    %v2506 = vadd.f32 %v2425, %v2505
    %v2507 = vpop.f32.mrf.mxu0
    %2508 = vdwg.mxu0
    %v2509 = vadd.f32 %v2501, %v2316
    %v2510 = vadd.f32 %v2506, %v2317
    %2511 = vst.msk [vmem:[#allocation23] sm:$0xff] %vm262, %v2509
    %2512 = vst.msk [vmem:[#allocation23 + $0x8] sm:$0xff] %vm262, %v2510
    // Predicated region
    $region142: #{tpu_custom_call.1} parent=1 // pred_check
      _
    $region143: #{tpu_custom_call.1} parent=1 // pred_check_branch
      %2514 = sbr.rel (0) target = $region145
    $region144: #{tpu_custom_call.1} parent=1 // pred_region
      %s2516 = ssub.s32 256, 256
      %2517 = vsyncadd [#allocation4], %s2516
      %s2518 = sshll.u32 [#allocation23], 4
      %s2519 = int_to_ptr.vmem [resolvable:$true] %s2518
      %2524 = dma.vmem_to_hbm [thread:$0]  %s2519, 256, %s22, [#allocation4], 128, 128, 8
    $region145: #{tpu_custom_call.1} parent=1 // pred_fallthru
      _
    // Predicated region
    $region146: #{tpu_custom_call.1} parent=1 // pred_check
      _
    $region147: #{tpu_custom_call.1} parent=1 // pred_check_branch
      %2526 = sbr.rel (0) target = $region149
    $region148: #{tpu_custom_call.1} parent=1 // pred_region
      %s2528 = ssub.s32 512, 512
      %2529 = vsyncadd [#allocation25], %s2528
      %s2530 = sshll.u32 [#allocation24], 4
      %s2531 = int_to_ptr.vmem [resolvable:$true] %s2530
      %2536 = dma.vmem_to_hbm [thread:$0]  %s2531, 512, %s23, [#allocation25], 128, 128, 8
    $region149: #{tpu_custom_call.1} parent=1 // pred_fallthru
      _
    // Predicated region
    $region150: #{tpu_custom_call.1} parent=1 // pred_check
      _
    $region151: #{tpu_custom_call.1} parent=1 // pred_check_branch
      %2538 = sbr.rel (0) target = $region153
    $region152: #{tpu_custom_call.1} parent=1 // pred_region
      %s2540 = ssub.s32 512, 512
      %2541 = vsyncadd [#allocation25], %s2540
      %s2542 = sshll.u32 [#allocation26], 4
      %s2543 = int_to_ptr.vmem [resolvable:$true] %s2542
      %2548 = dma.vmem_to_hbm [thread:$0]  %s2543, 512, %s24, [#allocation25], 128, 128, 8
    $region153: #{tpu_custom_call.1} parent=1 // pred_fallthru
      _
    // Predicated region
    $region154: #{tpu_custom_call.1} parent=1 // pred_check
      _
    $region155: #{tpu_custom_call.1} parent=1 // pred_check_branch
      %2550 = sbr.rel (0) target = $region157
    $region156: #{tpu_custom_call.1} parent=1 // pred_region
      %2551 = dma.done [#allocation4], 256
    $region157: #{tpu_custom_call.1} parent=1 // pred_fallthru
      _
    // Predicated region
    $region158: #{tpu_custom_call.1} parent=1 // pred_check
      _
    $region159: #{tpu_custom_call.1} parent=1 // pred_check_branch
      %2553 = sbr.rel (0) target = $region161
    $region160: #{tpu_custom_call.1} parent=1 // pred_region
      %2554 = dma.done [#allocation25], 512
    $region161: #{tpu_custom_call.1} parent=1 // pred_fallthru
      _
    // Predicated region
    $region162: #{tpu_custom_call.1} parent=1 // pred_check
      _
    $region163: #{tpu_custom_call.1} parent=1 // pred_check_branch
      %2556 = sbr.rel (0) target = $region165
    $region164: #{tpu_custom_call.1} parent=1 // pred_region
      %2557 = dma.done [#allocation25], 512
    $region165: #{tpu_custom_call.1} parent=1 // pred_fallthru
      _
    %2558 = vsyncpa [#allocation3], 1
    %2559 = vsyncpa [#allocation6], 1
    %2560 = vsyncpa [#allocation9], 1
    %2561 = vsyncpa [#allocation12], 1
    %2562 = vsyncpa [#allocation15], 1
    %2563 = vsyncpa [#allocation18], 1
    %2564 = vsyncpa [#allocation21], 1
    %2565 = vsyncpa [#allocation4], 1
    %2566 = vsyncpa [#allocation25], 1

</llo_original>
